<compile_context>
chip_gen: v6e
topology: v6e:2x2x1
jax: 0.10.0
libtpu: 0.0.40
codegen_flags: <defaults>
</compile_context>

<pallas_src>
import functools

import jax
import jax.numpy as jnp
from jax.experimental import pallas as pl
from jax.experimental.pallas import tpu as pltpu


# ---------------------------------------------------------------------------
# Kernel
# ---------------------------------------------------------------------------
def _ae_kernel(x_ref, *refs):
    """refs = (w_0..w_{L-1}, bias_pack_ref, o_ref).

    Weights: bf16 [in, out], zero-padded to a uniform hidden width.
    bias_pack: f32 [L, width].  x: [tb, d] (any float dtype, cast to bf16 for the MXU).
    """
    o_ref = refs[-1]
    b_ref = refs[-2]
    w_refs = refs[:-2]
    n_layers = len(w_refs)

    h = x_ref[...].astype(jnp.bfloat16)                 # bf16 operands for the MXU
    for i in range(n_layers):                           # static python loop -> fully unrolled
        acc = jnp.dot(h, w_refs[i][...], preferred_element_type=jnp.float32)
        acc = acc + b_ref[i:i + 1, : acc.shape[1]]      # f32 bias add (static row / width)
        if i < n_layers - 1:
            h = jnp.maximum(acc, 0.0).astype(jnp.bfloat16)   # ReLU in f32, recast for MXU
        else:
            o_ref[...] = acc.astype(o_ref.dtype)             # last layer: no activation


# ---------------------------------------------------------------------------
# Host-side parameter handling
# ---------------------------------------------------------------------------
def _round_up(x, m):
    return ((x + m - 1) // m) * m


def init_params(key, input_dim, encoder_layer_sizes):
    """PyTorch-style init. Returns list of (w, b): w is [in, out] f32, b is [out] f32."""
    enc_dims = [input_dim] + list(encoder_layer_sizes)
    dec_dims = [encoder_layer_sizes[-1]] + list(encoder_layer_sizes[:-1])[::-1] + [input_dim]

    params = []
    for dims in (enc_dims, dec_dims):
        for i in range(len(dims) - 1):
            fan_in, fan_out = dims[i], dims[i + 1]
            key, kw, kb = jax.random.split(key, 3)
            bound = 1.0 / float(fan_in) ** 0.5
            w = jax.random.uniform(kw, (fan_in, fan_out), jnp.float32, -bound, bound)
            b = jax.random.uniform(kb, (fan_out,), jnp.float32, -bound, bound)
            params.append((w, b))
    return params


def fold_and_pack(params):
    """Fold the activation-free pair (encoder-last, decoder-first) and pack operands.

    Returns (weights, bias_pack):
      weights  : tuple of bf16 [in, out] arrays with hidden widths zero-padded to one
                 uniform lane width (lane-dense vregs, no masked bias slices).  The
                 zero padding is mathematically exact.
      bias_pack: f32 [L, width] — one operand / one DMA instead of L tiny ones.
    """
    n = len(params)
    assert n >= 2 and n % 2 == 0
    mid = n // 2
    w3, b3 = params[mid - 1]           # encoder last Linear  (no activation after it)
    w4, b4 = params[mid]               # decoder first Linear
    w34 = w3 @ w4                      # fold two adjacent activation-free Linears
    b34 = b3 @ w4 + b4

    ws = [params[i][0] for i in range(mid - 1)] + [w34] + [params[i][0] for i in range(mid + 1, n)]
    bs = [params[i][1] for i in range(mid - 1)] + [b34] + [params[i][1] for i in range(mid + 1, n)]
    n_layers = len(ws)
    d_in = ws[0].shape[0]
    d_out = ws[-1].shape[1]

    # Uniform padded hidden width.  Bump it toward the I/O width (capped at 128 lanes) so
    # intermediates are lane-dense; MXU cost is unchanged for these small K/N.
    hidden = [w.shape[1] for w in ws[:-1]] or [d_in]
    pad_w = _round_up(max(hidden), 8)
    pad_w = max(pad_w, min(128, _round_up(max(d_in, d_out), 8)))

    padded_ws = []
    for i, w in enumerate(ws):
        rows = w.shape[0] if i == 0 else pad_w
        cols = w.shape[1] if i == n_layers - 1 else pad_w
        padded_ws.append(jnp.pad(w, ((0, rows - w.shape[0]), (0, cols - w.shape[1]))))

    bias_w = max(pad_w, d_out)
    bias_pack = jnp.zeros((n_layers, bias_w), jnp.float32)
    for i, b in enumerate(bs):
        bias_pack = bias_pack.at[i, : b.shape[0]].set(b)

    weights = tuple(w.astype(jnp.bfloat16) for w in padded_ws)
    return weights, bias_pack


# ---------------------------------------------------------------------------
# pallas_call wrapper
# ---------------------------------------------------------------------------
@functools.partial(jax.jit, static_argnames=("block_batch", "out_dtype"))
def autoencoder_forward(x, weights, bias_pack, *, block_batch=4096, out_dtype=jnp.float32):
    """Forward pass. x: [batch, d] (bf16 recommended: halves input HBM traffic)."""
    batch, d = x.shape
    d_out = weights[-1].shape[1]

    # ---- batch tile (always a multiple of 8; ragged last block handled by Pallas) ----
    block_batch = _round_up(max(int(block_batch), 8), 8)
    tb = min(block_batch, _round_up(batch, 8))
    # v7x has two TensorCores: ensure >= 2 "parallel" batch tiles when there is enough work.
    if batch > 16 and pl.cdiv(batch, tb) < 2:
        tb = max(8, _round_up(pl.cdiv(batch, 2), 8))
    grid = (pl.cdiv(batch, tb),)

    # ---- specs ------------------------------------------------------------------------
    in_specs = [pl.BlockSpec((tb, d), lambda i: (i, 0))]
    # Weights / packed biases: full-array blocks, constant index_map -> DMA'd once and
    # resident in VMEM across all batch tiles.
    in_specs += [pl.BlockSpec(w.shape, lambda i: (0, 0)) for w in weights]
    in_specs += [pl.BlockSpec(bias_pack.shape, lambda i: (0, 0))]
    out_specs = pl.BlockSpec((tb, d_out), lambda i: (i, 0))

    # ---- compiler params / cost hint ----------------------------------------------------
    itm_in = x.dtype.itemsize
    itm_out = jnp.dtype(out_dtype).itemsize
    weight_bytes = sum(w.size * w.dtype.itemsize for w in weights) + bias_pack.size * 4
    pad_w = weights[0].shape[1]
    vmem_est = (2 * tb * (d * itm_in + d_out * itm_out)        # double-buffered x / out tiles
                + weight_bytes                                  # resident weights + biases
                + 4 * tb * pad_w * 4)                           # f32 intermediates headroom
    cp_kwargs = dict(dimension_semantics=("parallel",))
    if vmem_est > 12 * 1024 * 1024:
        # Raise scoped-VMEM limit for very large tiles (v5e default is 16 MiB), but stay
        # safely below v7x's 64 MiB physical VMEM.
        cp_kwargs["vmem_limit_bytes"] = int(min(max(2 * vmem_est, 32 * 1024 * 1024),
                                                56 * 1024 * 1024))

    cost = pl.CostEstimate(
        flops=2 * batch * sum(w.shape[0] * w.shape[1] for w in weights),
        transcendentals=0,
        bytes_accessed=batch * (d * itm_in + d_out * itm_out) + weight_bytes,
    )

    return pl.pallas_call(
        _ae_kernel,
        out_shape=jax.ShapeDtypeStruct((batch, d_out), out_dtype),
        grid=grid,
        in_specs=in_specs,
        out_specs=out_specs,
        compiler_params=pltpu.CompilerParams(**cp_kwargs),
        cost_estimate=cost,
    )(x, *weights, bias_pack)


# ---------------------------------------------------------------------------
# Pure-JAX references
# ---------------------------------------------------------------------------
def reference_forward_f32(x, params):
    """Matches the PyTorch forward exactly in f32 (6 layers, no ReLU after layers 3 and 6)."""
    n = len(params)
    h = x.astype(jnp.float32)
    for i, (w, b) in enumerate(params):
        h = h @ w + b
        if i not in (n // 2 - 1, n - 1):
            h = jnp.maximum(h, 0.0)
    return h


def reference_forward_folded(x, weights, bias_pack):
    """Same math as the kernel (folded + padded layers, bf16 matmuls, f32 accumulate)."""
    n = len(weights)
    h = x.astype(jnp.bfloat16)
    for i, w in enumerate(weights):
        acc = jnp.dot(h, w, preferred_element_type=jnp.float32)
        acc = acc + bias_pack[i:i + 1, : w.shape[1]]
        h = jnp.maximum(acc, 0.0).astype(jnp.bfloat16) if i < n - 1 else acc
    return h


# ---------------------------------------------------------------------------
if __name__ == "__main__":
    # Autoencoder(input_dim=64, encoder_layer_sizes=[32, 16, 8], activation=ReLU)
    batch = 500            # deliberately NOT a multiple of the tile -> exercises ragged last block
    input_dim = 64
    encoder_layer_sizes = [32, 16, 8]

    key = jax.random.PRNGKey(0)
    key_x, key_p = jax.random.split(key)
    # Feed x as bf16 (the kernel computes bf16 x f32-acc anyway; this halves input DMA traffic).
    x = jax.random.normal(key_x, (batch, input_dim), dtype=jnp.float32).astype(jnp.bfloat16)

    params = init_params(key_p, input_dim, encoder_layer_sizes)
    weights, bias_pack = fold_and_pack(params)

    # block_batch=128 only because the demo batch is tiny (gives 4 grid steps);
    # the production default is 4096.
    out = autoencoder_forward(x, weights, bias_pack, block_batch=128)
    out = jax.block_until_ready(out)
    assert out.shape == (batch, input_dim)
    assert out.dtype == jnp.float32

    # Tight check vs. a JAX reference using identical folded/padded bf16 math.
    ref_folded = reference_forward_folded(x, weights, bias_pack)
    assert jnp.allclose(out, ref_folded, atol=2e-2, rtol=2e-2), "mismatch vs. folded bf16 reference"

    # Loose check vs. the exact f32 PyTorch-equivalent forward (bf16 quantization expected).
    ref_f32 = reference_forward_f32(x, params)
    assert jnp.allclose(out, ref_f32, atol=7e-2, rtol=7e-2), "mismatch vs. f32 PyTorch reference"

    print("KERNEL_OK")
</pallas_src>

<mosaic_0001>
module attributes {stable_mosaic.version = 11 : i64} {
  func.func @_ae_kernel(%arg0: i32, %arg1: memref<128x64xbf16, #tpu.memory_space<vmem>>, %arg2: memref<64x64xbf16, #tpu.memory_space<vmem>>, %arg3: memref<64x64xbf16, #tpu.memory_space<vmem>>, %arg4: memref<64x64xbf16, #tpu.memory_space<vmem>>, %arg5: memref<64x64xbf16, #tpu.memory_space<vmem>>, %arg6: memref<64x64xbf16, #tpu.memory_space<vmem>>, %arg7: memref<5x64xf32, #tpu.memory_space<vmem>>, %arg8: memref<128x64xf32, #tpu.memory_space<vmem>>) attributes {dimension_semantics = [#tpu.dimension_semantics<parallel>], iteration_bounds = array<i64: 4>, scalar_prefetch = 0 : i64, scratch_operands = 0 : i64, tpu.core_type = #tpu.core_type<tc>, window_params = [{transform_indices = @transform_0, window_bounds = array<i64: 128, 64>}, {pipeline_mode = #tpu.pipeline_mode<synchronous>, transform_indices = @transform_1, window_bounds = array<i64: 64, 64>}, {pipeline_mode = #tpu.pipeline_mode<synchronous>, transform_indices = @transform_2, window_bounds = array<i64: 64, 64>}, {pipeline_mode = #tpu.pipeline_mode<synchronous>, transform_indices = @transform_3, window_bounds = array<i64: 64, 64>}, {pipeline_mode = #tpu.pipeline_mode<synchronous>, transform_indices = @transform_4, window_bounds = array<i64: 64, 64>}, {pipeline_mode = #tpu.pipeline_mode<synchronous>, transform_indices = @transform_5, window_bounds = array<i64: 64, 64>}, {pipeline_mode = #tpu.pipeline_mode<synchronous>, transform_indices = @transform_6, window_bounds = array<i64: 5, 64>}, {transform_indices = @transform_7, window_bounds = array<i64: 128, 64>}]} {
    %c0 = arith.constant 0 : index
    %c0_0 = arith.constant 0 : index
    %0 = vector.load %arg1[%c0, %c0_0] : memref<128x64xbf16, #tpu.memory_space<vmem>>, vector<128x64xbf16>
    %c0_1 = arith.constant 0 : index
    %c0_2 = arith.constant 0 : index
    %1 = vector.load %arg2[%c0_1, %c0_2] : memref<64x64xbf16, #tpu.memory_space<vmem>>, vector<64x64xbf16>
    %cst = arith.constant dense<0.000000e+00> : vector<128x64xf32>
    %2 = tpu.matmul %0, %1, %cst {dimension_numbers = #tpu.dot_dimension_numbers<[1], [0], [0], [1], [0, 0, 1, 1], [], []>} : vector<128x64xbf16>, vector<64x64xbf16>, vector<128x64xf32> -> vector<128x64xf32>
    %c0_3 = arith.constant 0 : index
    %c0_4 = arith.constant 0 : index
    %3 = vector.load %arg7[%c0_3, %c0_4] : memref<5x64xf32, #tpu.memory_space<vmem>>, vector<1x64xf32>
    %4 = vector.broadcast %3 : vector<1x64xf32> to vector<128x64xf32>
    %5 = arith.addf %2, %4 : vector<128x64xf32>
    %cst_5 = arith.constant 0.000000e+00 : f32
    %6 = vector.broadcast %cst_5 : f32 to vector<128x64xf32>
    %7 = arith.maximumf %5, %6 : vector<128x64xf32>
    %8 = arith.truncf %7 : vector<128x64xf32> to vector<128x64xbf16>
    %c0_6 = arith.constant 0 : index
    %c0_7 = arith.constant 0 : index
    %9 = vector.load %arg3[%c0_6, %c0_7] : memref<64x64xbf16, #tpu.memory_space<vmem>>, vector<64x64xbf16>
    %cst_8 = arith.constant dense<0.000000e+00> : vector<128x64xf32>
    %10 = tpu.matmul %8, %9, %cst_8 {dimension_numbers = #tpu.dot_dimension_numbers<[1], [0], [0], [1], [0, 0, 1, 1], [], []>} : vector<128x64xbf16>, vector<64x64xbf16>, vector<128x64xf32> -> vector<128x64xf32>
    %c1 = arith.constant 1 : index
    %c0_9 = arith.constant 0 : index
    %11 = vector.load %arg7[%c1, %c0_9] : memref<5x64xf32, #tpu.memory_space<vmem>>, vector<1x64xf32>
    %12 = vector.broadcast %11 : vector<1x64xf32> to vector<128x64xf32>
    %13 = arith.addf %10, %12 : vector<128x64xf32>
    %cst_10 = arith.constant 0.000000e+00 : f32
    %14 = vector.broadcast %cst_10 : f32 to vector<128x64xf32>
    %15 = arith.maximumf %13, %14 : vector<128x64xf32>
    %16 = arith.truncf %15 : vector<128x64xf32> to vector<128x64xbf16>
    %c0_11 = arith.constant 0 : index
    %c0_12 = arith.constant 0 : index
    %17 = vector.load %arg4[%c0_11, %c0_12] : memref<64x64xbf16, #tpu.memory_space<vmem>>, vector<64x64xbf16>
    %cst_13 = arith.constant dense<0.000000e+00> : vector<128x64xf32>
    %18 = tpu.matmul %16, %17, %cst_13 {dimension_numbers = #tpu.dot_dimension_numbers<[1], [0], [0], [1], [0, 0, 1, 1], [], []>} : vector<128x64xbf16>, vector<64x64xbf16>, vector<128x64xf32> -> vector<128x64xf32>
    %c2 = arith.constant 2 : index
    %c0_14 = arith.constant 0 : index
    %19 = vector.load %arg7[%c2, %c0_14] : memref<5x64xf32, #tpu.memory_space<vmem>>, vector<1x64xf32>
    %20 = vector.broadcast %19 : vector<1x64xf32> to vector<128x64xf32>
    %21 = arith.addf %18, %20 : vector<128x64xf32>
    %cst_15 = arith.constant 0.000000e+00 : f32
    %22 = vector.broadcast %cst_15 : f32 to vector<128x64xf32>
    %23 = arith.maximumf %21, %22 : vector<128x64xf32>
    %24 = arith.truncf %23 : vector<128x64xf32> to vector<128x64xbf16>
    %c0_16 = arith.constant 0 : index
    %c0_17 = arith.constant 0 : index
    %25 = vector.load %arg5[%c0_16, %c0_17] : memref<64x64xbf16, #tpu.memory_space<vmem>>, vector<64x64xbf16>
    %cst_18 = arith.constant dense<0.000000e+00> : vector<128x64xf32>
    %26 = tpu.matmul %24, %25, %cst_18 {dimension_numbers = #tpu.dot_dimension_numbers<[1], [0], [0], [1], [0, 0, 1, 1], [], []>} : vector<128x64xbf16>, vector<64x64xbf16>, vector<128x64xf32> -> vector<128x64xf32>
    %c3 = arith.constant 3 : index
    %c0_19 = arith.constant 0 : index
    %27 = vector.load %arg7[%c3, %c0_19] : memref<5x64xf32, #tpu.memory_space<vmem>>, vector<1x64xf32>
    %28 = vector.broadcast %27 : vector<1x64xf32> to vector<128x64xf32>
    %29 = arith.addf %26, %28 : vector<128x64xf32>
    %cst_20 = arith.constant 0.000000e+00 : f32
    %30 = vector.broadcast %cst_20 : f32 to vector<128x64xf32>
    %31 = arith.maximumf %29, %30 : vector<128x64xf32>
    %32 = arith.truncf %31 : vector<128x64xf32> to vector<128x64xbf16>
    %c0_21 = arith.constant 0 : index
    %c0_22 = arith.constant 0 : index
    %33 = vector.load %arg6[%c0_21, %c0_22] : memref<64x64xbf16, #tpu.memory_space<vmem>>, vector<64x64xbf16>
    %cst_23 = arith.constant dense<0.000000e+00> : vector<128x64xf32>
    %34 = tpu.matmul %32, %33, %cst_23 {dimension_numbers = #tpu.dot_dimension_numbers<[1], [0], [0], [1], [0, 0, 1, 1], [], []>} : vector<128x64xbf16>, vector<64x64xbf16>, vector<128x64xf32> -> vector<128x64xf32>
    %c4 = arith.constant 4 : index
    %c0_24 = arith.constant 0 : index
    %35 = vector.load %arg7[%c4, %c0_24] : memref<5x64xf32, #tpu.memory_space<vmem>>, vector<1x64xf32>
    %36 = vector.broadcast %35 : vector<1x64xf32> to vector<128x64xf32>
    %37 = arith.addf %34, %36 : vector<128x64xf32>
    %c0_25 = arith.constant 0 : index
    %c0_26 = arith.constant 0 : index
    %38 = vector.load %arg8[%c0_25, %c0_26] : memref<128x64xf32, #tpu.memory_space<vmem>>, vector<128x64xf32>
    tpu.vector_store %arg8[%c0_25, %c0_26], %37 {strides = array<i32>} : memref<128x64xf32, #tpu.memory_space<vmem>>, vector<128x64xf32>,
    return
  }
  func.func @transform_0(%arg0: i32) -> (i32, i32) {
    %c0_i32 = arith.constant 0 : i32
    %c0_i32_0 = arith.constant 0 : i32
    return %arg0, %c0_i32 : i32, i32
  }
  func.func @transform_1(%arg0: i32) -> (i32, i32) {
    %c0_i32 = arith.constant 0 : i32
    %c0_i32_0 = arith.constant 0 : i32
    %c0_i32_1 = arith.constant 0 : i32
    return %c0_i32, %c0_i32_0 : i32, i32
  }
  func.func @transform_2(%arg0: i32) -> (i32, i32) {
    %c0_i32 = arith.constant 0 : i32
    %c0_i32_0 = arith.constant 0 : i32
    %c0_i32_1 = arith.constant 0 : i32
    return %c0_i32, %c0_i32_0 : i32, i32
  }
  func.func @transform_3(%arg0: i32) -> (i32, i32) {
    %c0_i32 = arith.constant 0 : i32
    %c0_i32_0 = arith.constant 0 : i32
    %c0_i32_1 = arith.constant 0 : i32
    return %c0_i32, %c0_i32_0 : i32, i32
  }
  func.func @transform_4(%arg0: i32) -> (i32, i32) {
    %c0_i32 = arith.constant 0 : i32
    %c0_i32_0 = arith.constant 0 : i32
    %c0_i32_1 = arith.constant 0 : i32
    return %c0_i32, %c0_i32_0 : i32, i32
  }
  func.func @transform_5(%arg0: i32) -> (i32, i32) {
    %c0_i32 = arith.constant 0 : i32
    %c0_i32_0 = arith.constant 0 : i32
    %c0_i32_1 = arith.constant 0 : i32
    return %c0_i32, %c0_i32_0 : i32, i32
  }
  func.func @transform_6(%arg0: i32) -> (i32, i32) {
    %c0_i32 = arith.constant 0 : i32
    %c0_i32_0 = arith.constant 0 : i32
    %c0_i32_1 = arith.constant 0 : i32
    return %c0_i32, %c0_i32_0 : i32, i32
  }
  func.func @transform_7(%arg0: i32) -> (i32, i32) {
    %c0_i32 = arith.constant 0 : i32
    %c0_i32_0 = arith.constant 0 : i32
    return %arg0, %c0_i32 : i32, i32
  }
}

</mosaic_0001>

<llo_original>
// kernel: autoencoder_forward.1
$region0: #{autoencoder_forward.1}
  #allocation0 [shape = 'u32[]', space=smem, size = 0x4, offset = 0x4, fixed_abs, tag = 'smem constant byte address 0x4 - core index']
  #allocation1 [shape = 'u32[144,128]{1,0:T(1,128)}', space=vmem, size = 0x12000, scoped, tag = 'internal scratch']
  %s0 = inlined_call_operand.vmem [shape: bf16[500,64], index: 0, kind: input, shape index: {}]
  %s1 = inlined_call_operand.vmem [shape: bf16[64,64], index: 1, kind: input, shape index: {}]
  %s2 = inlined_call_operand.vmem [shape: bf16[64,64], index: 2, kind: input, shape index: {}]
  %s3 = inlined_call_operand.vmem [shape: bf16[64,64], index: 3, kind: input, shape index: {}]
  %s4 = inlined_call_operand.vmem [shape: bf16[64,64], index: 4, kind: input, shape index: {}]
  %s5 = inlined_call_operand.vmem [shape: bf16[64,64], index: 5, kind: input, shape index: {}]
  %s6 = inlined_call_operand.vmem [shape: f32[5,64], index: 6, kind: input, shape index: {}]
  %s7 = inlined_call_operand.vmem [shape: f32[500,64], index: 7, kind: output, shape index: {}]
  %s8 = sld [smem:[#allocation0]]
  $region109: #{autoencoder_forward.1} parent=0
    _
  %s10 = ssub.s32 1, %s8
  %s11 = scalar_select 0, %s10, %s8
  $region1: #{autoencoder_forward.1} parent=0
    #allocation2 [shape = 'u8[131072]{0}', space=vmem, size = 0x20000, scoped, tag = 'output window, operand 0']
    loop: start=0, step=1, limit=6
    $region2: #{autoencoder_forward.1} parent=1 // loop_pre_header
      _
    $region3: #{autoencoder_forward.1} parent=1 // loop_header
      %s13 = sphi 0, %s17
      %p14 = scmp.ge.s32.totalorder %s13, 6
      %s23 = sphi 0, %s25
      %s26 = sphi 0, %s23
      %s27 = sphi 0, %s26
      %s43 = sphi 0, %s27
      %s47 = sphi 0, %s47
      %s49 = sphi 0, %s47
      %s50 = sphi 0, %s49
      %s64 = sphi 0, %s50
      %s68 = sphi 0, %s68
      %s70 = sphi 0, %s68
      %s71 = sphi 0, %s70
      %s85 = sphi 0, %s71
      %s89 = sphi 0, %s89
      %s91 = sphi 0, %s89
      %s92 = sphi 0, %s91
      %s106 = sphi 0, %s92
      %s110 = sphi 0, %s110
      %s112 = sphi 0, %s110
      %s113 = sphi 0, %s112
      %s127 = sphi 0, %s113
      %s131 = sphi 0, %s131
      %s133 = sphi 0, %s131
      %s134 = sphi 0, %s133
      %s148 = sphi 0, %s134
      %s152 = sphi 0, %s152
      %s154 = sphi 0, %s152
      %s155 = sphi 0, %s154
      %s169 = sphi 0, %s155
      %s175 = sphi 0, %s177
      %s178 = sphi 0, %s175
      %s179 = sphi 0, %s178
      %s195 = sphi 0, %s179
    $region4: #{autoencoder_forward.1} parent=1 // loop_header_branch
      %16 = sbr.rel (%p14) target = $region8
    $region5: #{autoencoder_forward.1} parent=1 // loop_body
      %s18 = ssub.s32 %s13, 1
      %s19 = ssub.s32 %s13, 2
      %s20 = sadd.s32 %s13, 1
      %s21 = ssub.s32 %s13, %s20
      %p22 = scmp.eq.s32.totalorder %s21, 0
      %s24 = sadd.s32 %s23, 1
      %s25 = scalar_select %p22, %s23, %s24
      %p28 = pneg %p22
      %p29 = scmp.eq.s32.totalorder %s13, 3
      %p30 = por %p28, %p29
      %p31 = scmp.ne.s32.totalorder %s23, %s26
      %p32 = scmp.eq.s32.totalorder %s13, 0
      %p33 = por %p31, %p32
      %p34 = scmp.ne.s32.totalorder %s23, %s26
      %p35 = scmp.eq.s32.totalorder %s18, 3
      %p36 = por %p34, %p35
      %p37 = scmp.ne.s32.totalorder %s26, %s27
      %p38 = scmp.eq.s32.totalorder %s18, 0
      %p39 = por %p37, %p38
      %p40 = scmp.ne.s32.totalorder %s26, %s27
      %p41 = scmp.eq.s32.totalorder %s19, 3
      %p42 = por %p40, %p41
      %p44 = scmp.ne.s32.totalorder %s27, %s43
      %p45 = scmp.eq.s32.totalorder %s19, 0
      %p46 = por %p44, %p45
      %s48 = sadd.s32 %s47, 1
      %p51 = scmp.eq.s32.totalorder %s13, 3
      %p52 = scmp.ne.s32.totalorder %s47, %s49
      %p53 = scmp.eq.s32.totalorder %s13, 0
      %p54 = por %p52, %p53
      %p55 = scmp.ne.s32.totalorder %s47, %s49
      %p56 = scmp.eq.s32.totalorder %s18, 3
      %p57 = por %p55, %p56
      %p58 = scmp.ne.s32.totalorder %s49, %s50
      %p59 = scmp.eq.s32.totalorder %s18, 0
      %p60 = por %p58, %p59
      %p61 = scmp.ne.s32.totalorder %s49, %s50
      %p62 = scmp.eq.s32.totalorder %s19, 3
      %p63 = por %p61, %p62
      %p65 = scmp.ne.s32.totalorder %s50, %s64
      %p66 = scmp.eq.s32.totalorder %s19, 0
      %p67 = por %p65, %p66
      %s69 = sadd.s32 %s68, 1
      %p72 = scmp.eq.s32.totalorder %s13, 3
      %p73 = scmp.ne.s32.totalorder %s68, %s70
      %p74 = scmp.eq.s32.totalorder %s13, 0
      %p75 = por %p73, %p74
      %p76 = scmp.ne.s32.totalorder %s68, %s70
      %p77 = scmp.eq.s32.totalorder %s18, 3
      %p78 = por %p76, %p77
      %p79 = scmp.ne.s32.totalorder %s70, %s71
      %p80 = scmp.eq.s32.totalorder %s18, 0
      %p81 = por %p79, %p80
      %p82 = scmp.ne.s32.totalorder %s70, %s71
      %p83 = scmp.eq.s32.totalorder %s19, 3
      %p84 = por %p82, %p83
      %p86 = scmp.ne.s32.totalorder %s71, %s85
      %p87 = scmp.eq.s32.totalorder %s19, 0
      %p88 = por %p86, %p87
      %s90 = sadd.s32 %s89, 1
      %p93 = scmp.eq.s32.totalorder %s13, 3
      %p94 = scmp.ne.s32.totalorder %s89, %s91
      %p95 = scmp.eq.s32.totalorder %s13, 0
      %p96 = por %p94, %p95
      %p97 = scmp.ne.s32.totalorder %s89, %s91
      %p98 = scmp.eq.s32.totalorder %s18, 3
      %p99 = por %p97, %p98
      %p100 = scmp.ne.s32.totalorder %s91, %s92
      %p101 = scmp.eq.s32.totalorder %s18, 0
      %p102 = por %p100, %p101
      %p103 = scmp.ne.s32.totalorder %s91, %s92
      %p104 = scmp.eq.s32.totalorder %s19, 3
      %p105 = por %p103, %p104
      %p107 = scmp.ne.s32.totalorder %s92, %s106
      %p108 = scmp.eq.s32.totalorder %s19, 0
      %p109 = por %p107, %p108
      %s111 = sadd.s32 %s110, 1
      %p114 = scmp.eq.s32.totalorder %s13, 3
      %p115 = scmp.ne.s32.totalorder %s110, %s112
      %p116 = scmp.eq.s32.totalorder %s13, 0
      %p117 = por %p115, %p116
      %p118 = scmp.ne.s32.totalorder %s110, %s112
      %p119 = scmp.eq.s32.totalorder %s18, 3
      %p120 = por %p118, %p119
      %p121 = scmp.ne.s32.totalorder %s112, %s113
      %p122 = scmp.eq.s32.totalorder %s18, 0
      %p123 = por %p121, %p122
      %p124 = scmp.ne.s32.totalorder %s112, %s113
      %p125 = scmp.eq.s32.totalorder %s19, 3
      %p126 = por %p124, %p125
      %p128 = scmp.ne.s32.totalorder %s113, %s127
      %p129 = scmp.eq.s32.totalorder %s19, 0
      %p130 = por %p128, %p129
      %s132 = sadd.s32 %s131, 1
      %p135 = scmp.eq.s32.totalorder %s13, 3
      %p136 = scmp.ne.s32.totalorder %s131, %s133
      %p137 = scmp.eq.s32.totalorder %s13, 0
      %p138 = por %p136, %p137
      %p139 = scmp.ne.s32.totalorder %s131, %s133
      %p140 = scmp.eq.s32.totalorder %s18, 3
      %p141 = por %p139, %p140
      %p142 = scmp.ne.s32.totalorder %s133, %s134
      %p143 = scmp.eq.s32.totalorder %s18, 0
      %p144 = por %p142, %p143
      %p145 = scmp.ne.s32.totalorder %s133, %s134
      %p146 = scmp.eq.s32.totalorder %s19, 3
      %p147 = por %p145, %p146
      %p149 = scmp.ne.s32.totalorder %s134, %s148
      %p150 = scmp.eq.s32.totalorder %s19, 0
      %p151 = por %p149, %p150
      %s153 = sadd.s32 %s152, 1
      %p156 = scmp.eq.s32.totalorder %s13, 3
      %p157 = scmp.ne.s32.totalorder %s152, %s154
      %p158 = scmp.eq.s32.totalorder %s13, 0
      %p159 = por %p157, %p158
      %p160 = scmp.ne.s32.totalorder %s152, %s154
      %p161 = scmp.eq.s32.totalorder %s18, 3
      %p162 = por %p160, %p161
      %p163 = scmp.ne.s32.totalorder %s154, %s155
      %p164 = scmp.eq.s32.totalorder %s18, 0
      %p165 = por %p163, %p164
      %p166 = scmp.ne.s32.totalorder %s154, %s155
      %p167 = scmp.eq.s32.totalorder %s19, 3
      %p168 = por %p166, %p167
      %p170 = scmp.ne.s32.totalorder %s155, %s169
      %p171 = scmp.eq.s32.totalorder %s19, 0
      %p172 = por %p170, %p171
      %s173 = ssub.s32 %s13, %s20
      %p174 = scmp.eq.s32.totalorder %s173, 0
      %s176 = sadd.s32 %s175, 1
      %s177 = scalar_select %p174, %s175, %s176
      %p180 = pneg %p174
      %p181 = scmp.eq.s32.totalorder %s13, 3
      %p182 = por %p180, %p181
      %p183 = scmp.ne.s32.totalorder %s175, %s178
      %p184 = scmp.eq.s32.totalorder %s13, 0
      %p185 = por %p183, %p184
      %p186 = scmp.ne.s32.totalorder %s175, %s178
      %p187 = scmp.eq.s32.totalorder %s18, 3
      %p188 = por %p186, %p187
      %p189 = scmp.ne.s32.totalorder %s178, %s179
      %p190 = scmp.eq.s32.totalorder %s18, 0
      %p191 = por %p189, %p190
      %p192 = scmp.ne.s32.totalorder %s178, %s179
      %p193 = scmp.eq.s32.totalorder %s19, 3
      %p194 = por %p192, %p193
      %p196 = scmp.ne.s32.totalorder %s179, %s195
      %p197 = scmp.eq.s32.totalorder %s19, 0
      %p198 = por %p196, %p197
      %p199 = scmp.le.s32.totalorder 1, %s13
      %p200 = scmp.lt.s32.totalorder %s13, 5
      %p201 = pnand %p199, %p200
      %p202 = pneg %p201
      // Predicated region
      $region9: #{autoencoder_forward.1} parent=5 // pred_check
        _
      $region10: #{autoencoder_forward.1} parent=5 // pred_check_branch
        %204 = sbr.rel (%p201) target = $region12
      $region11: #{autoencoder_forward.1} parent=5 // pred_region
        %s205 = ssub.s32 %s13, 1
        // Predicated region
        $region13: #{autoencoder_forward.1} parent=11 // pred_check
          %p206 = pneg %p60
        $region14: #{autoencoder_forward.1} parent=11 // pred_check_branch
          %208 = sbr.rel (%p206) target = $region16
        $region15: #{autoencoder_forward.1} parent=11 // pred_region
          _
        $region16: #{autoencoder_forward.1} parent=11 // pred_fallthru
          _
        // Predicated region
        $region17: #{autoencoder_forward.1} parent=11 // pred_check
          %p209 = pneg %p81
        $region18: #{autoencoder_forward.1} parent=11 // pred_check_branch
          %211 = sbr.rel (%p209) target = $region20
        $region19: #{autoencoder_forward.1} parent=11 // pred_region
          _
        $region20: #{autoencoder_forward.1} parent=11 // pred_fallthru
          _
        // Predicated region
        $region21: #{autoencoder_forward.1} parent=11 // pred_check
          %p212 = pneg %p102
        $region22: #{autoencoder_forward.1} parent=11 // pred_check_branch
          %214 = sbr.rel (%p212) target = $region24
        $region23: #{autoencoder_forward.1} parent=11 // pred_region
          _
        $region24: #{autoencoder_forward.1} parent=11 // pred_fallthru
          _
        // Predicated region
        $region25: #{autoencoder_forward.1} parent=11 // pred_check
          %p215 = pneg %p123
        $region26: #{autoencoder_forward.1} parent=11 // pred_check_branch
          %217 = sbr.rel (%p215) target = $region28
        $region27: #{autoencoder_forward.1} parent=11 // pred_region
          _
        $region28: #{autoencoder_forward.1} parent=11 // pred_fallthru
          _
        // Predicated region
        $region29: #{autoencoder_forward.1} parent=11 // pred_check
          %p218 = pneg %p144
        $region30: #{autoencoder_forward.1} parent=11 // pred_check_branch
          %220 = sbr.rel (%p218) target = $region32
        $region31: #{autoencoder_forward.1} parent=11 // pred_region
          _
        $region32: #{autoencoder_forward.1} parent=11 // pred_fallthru
          _
        // Predicated region
        $region33: #{autoencoder_forward.1} parent=11 // pred_check
          %p221 = pneg %p165
        $region34: #{autoencoder_forward.1} parent=11 // pred_check_branch
          %223 = sbr.rel (%p221) target = $region36
        $region35: #{autoencoder_forward.1} parent=11 // pred_region
          _
        $region36: #{autoencoder_forward.1} parent=11 // pred_fallthru
          _
      $region12: #{autoencoder_forward.1} parent=5 // pred_fallthru
        _
      %p224 = scmp.lt.s32.totalorder %s13, 4
      // Predicated region
      $region37: #{autoencoder_forward.1} parent=5 // pred_check
        %p225 = pneg %p224
      $region38: #{autoencoder_forward.1} parent=5 // pred_check_branch
        %227 = sbr.rel (%p225) target = $region40
      $region39: #{autoencoder_forward.1} parent=5 // pred_region
        // Predicated region
        $region41: #{autoencoder_forward.1} parent=39 // pred_check
          %p228 = pneg %p33
        $region42: #{autoencoder_forward.1} parent=39 // pred_check_branch
          %230 = sbr.rel (%p228) target = $region44
        $region43: #{autoencoder_forward.1} parent=39 // pred_region
          %s231 = smul.u32 16, %s13
          %s232 = ssub.s32 63, %s231
          %p233 = scmp.lt.s32.totalorder %s232, 16
          %s234 = scalar_select %p233, %s232, 16
          %s235 = smul.u32 64, %s234
          %p236 = scmp.lt.s32.totalorder %s231, 62
          %s237 = scalar_select %p236, %s231, 62
          %s238 = smul.addr %s237, 4
          %s239 = scalar_lea.vmem %s0, %s238
          %s240 = smul.u32 16, %s13
          %s241 = ssub.s32 63, %s240
          %p242 = scmp.lt.s32.totalorder %s241, 16
          %s243 = scalar_select %p242, %s241, 16
          %s244 = smul.u32 64, %s243
        $region44: #{autoencoder_forward.1} parent=39 // pred_fallthru
          _
      $region40: #{autoencoder_forward.1} parent=5 // pred_fallthru
        _
      %p245 = scmp.le.s32.totalorder 1, %s13
      %p246 = scmp.lt.s32.totalorder %s13, 5
      %p247 = pnand %p245, %p246
      %p248 = pneg %p247
      // Predicated region
      $region45: #{autoencoder_forward.1} parent=5 // pred_check
        _
      $region46: #{autoencoder_forward.1} parent=5 // pred_check_branch
        %250 = sbr.rel (%p247) target = $region48
      $region47: #{autoencoder_forward.1} parent=5 // pred_region
        %s251 = ssub.s32 %s13, 1
        %s252 = smul.u32 16, %s18
        %s253 = ssub.s32 63, %s252
        %p254 = scmp.lt.s32.totalorder %s253, 16
        %s255 = scalar_select %p254, %s253, 16
        %s256 = smul.u32 64, %s255
        %p257 = scmp.lt.s32.totalorder %s252, 62
        %s258 = scalar_select %p257, %s252, 62
        %s259 = smul.addr %s258, 4
        %s260 = scalar_lea.vmem %s0, %s259
        %p261 = pneg %p39
        %p262 = pneg %p36
        %p263 = pneg %p60
        %p264 = pneg %p57
        %p265 = pneg %p81
        %p266 = pneg %p78
        %p267 = pneg %p102
        %p268 = pneg %p99
        %p269 = pneg %p123
        %p270 = pneg %p120
        %p271 = pneg %p144
        %p272 = pneg %p141
        %p273 = pneg %p165
        %p274 = pneg %p162
        %p275 = pneg %p191
        %p276 = pneg %p188
        %s277 = sand.u32 %s178, 1
        %s278 = sand.u32 %s178, 1
        %s279 = smul.addr %s278, 128
        %s280 = scalar_lea.vmem [#allocation2], %s279
        %s281 = smul.u32 16, %s18
        %s282 = ssub.s32 63, %s281
        %p283 = scmp.lt.s32.totalorder %s282, 16
        %s284 = scalar_select %p283, %s282, 16
        %s285 = smul.u32 64, %s284
        %p286 = scmp.lt.s32.totalorder %s281, 62
        %s287 = scalar_select %p286, %s281, 62
        %s288 = smul.addr %s287, 4
        %s289 = scalar_lea.vmem %s0, %s288
        %s290 = smul.u32 16, %s18
        %s291 = ssub.s32 63, %s290
        %p292 = scmp.lt.s32.totalorder %s291, 16
        %s293 = scalar_select %p292, %s291, 16
        %s294 = smul.u32 64, %s293
        %s295 = smul.u32 16, %s18
        %s296 = ssub.s32 63, %s295
        %p297 = scmp.lt.s32.totalorder %s296, 16
        %s298 = scalar_select %p297, %s296, 16
        %s299 = smul.u32 128, %s298
        %v301 = vld [vmem:[%s289] sm:$0xf]
        %v302 = vld [vmem:[%s289 + $0x4] sm:$0xf]
        %v303 = vld [vmem:[%s289 + $0x8] sm:$0xf]
        %v304 = vld [vmem:[%s289 + $0xc] sm:$0xf]
        %v305 = vld [vmem:[%s289 + $0x10] sm:$0xf]
        %v306 = vld [vmem:[%s289 + $0x14] sm:$0xf]
        %v307 = vld [vmem:[%s289 + $0x18] sm:$0xf]
        %v308 = vld [vmem:[%s289 + $0x1c] sm:$0xf]
        %v309 = vld [vmem:[%s289 + $0x20] sm:$0xf]
        %v310 = vld [vmem:[%s289 + $0x24] sm:$0xf]
        %v311 = vld [vmem:[%s289 + $0x28] sm:$0xf]
        %v312 = vld [vmem:[%s289 + $0x2c] sm:$0xf]
        %v313 = vld [vmem:[%s289 + $0x30] sm:$0xf]
        %v314 = vld [vmem:[%s289 + $0x34] sm:$0xf]
        %v315 = vld [vmem:[%s289 + $0x38] sm:$0xf]
        %v316 = vld [vmem:[%s289 + $0x3c] sm:$0xf]
        %v317 = vld [vmem:[%s1] sm:$0xf]
        %v318 = vld [vmem:[%s1 + $0x4] sm:$0xf]
        %v319 = vld [vmem:[%s1 + $0x8] sm:$0xf]
        %v320 = vld [vmem:[%s1 + $0xc] sm:$0xf]
        %v321 = vld [vmem:[%s1 + $0x10] sm:$0xf]
        %v322 = vld [vmem:[%s1 + $0x14] sm:$0xf]
        %v323 = vld [vmem:[%s1 + $0x18] sm:$0xf]
        %v324 = vld [vmem:[%s1 + $0x1c] sm:$0xf]
        %v325 = vld [vmem:[%s6] sm:$0x1]
        %v326 = vlaneseq
        %v327 = vshrl.u32 %v326, 7
        %v328 = vsub.s32 0, %v327
        %v329 = vrot.slane %v325, %v328
        %v346 = vunpack.c.l.b16 %v301
        %v347 = vunpack.c.l.b16 %v302
        %v348 = vunpack.c.l.b16 %v303
        %v349 = vunpack.c.l.b16 %v304
        %v350 = vunpack.c.l.b16 %v305
        %v351 = vunpack.c.l.b16 %v306
        %v352 = vunpack.c.l.b16 %v307
        %v353 = vunpack.c.l.b16 %v308
        %v354 = vunpack.c.l.b16 %v309
        %v355 = vunpack.c.l.b16 %v310
        %v356 = vunpack.c.l.b16 %v311
        %v357 = vunpack.c.l.b16 %v312
        %v358 = vunpack.c.l.b16 %v313
        %v359 = vunpack.c.l.b16 %v314
        %v360 = vunpack.c.l.b16 %v315
        %v361 = vunpack.c.l.b16 %v316
        %v362 = vpack.c.b16 %v347, %v346
        %v363 = vpack.c.b16 %v349, %v348
        %v364 = vpack.c.b16 %v351, %v350
        %v365 = vpack.c.b16 %v353, %v352
        %v366 = vpack.c.b16 %v355, %v354
        %v367 = vpack.c.b16 %v357, %v356
        %v368 = vpack.c.b16 %v359, %v358
        %v369 = vpack.c.b16 %v361, %v360
        %v378 = vunpack.c.l.b16 %v317
        %v379 = vunpack.c.l.b16 %v318
        %v380 = vunpack.c.l.b16 %v319
        %v381 = vunpack.c.l.b16 %v320
        %v382 = vunpack.c.l.b16 %v321
        %v383 = vunpack.c.l.b16 %v322
        %v384 = vunpack.c.l.b16 %v323
        %v385 = vunpack.c.l.b16 %v324
        %v386 = vpack.c.b16 %v379, %v378
        %v387 = vpack.c.b16 %v381, %v380
        %v388 = vpack.c.b16 %v383, %v382
        %v389 = vpack.c.b16 %v385, %v384
        %vm394 = vcmask 523264
        %v396 = vsel %vm394, %v362, 0
        %v399 = vsel %vm394, %v363, 0
        %v402 = vsel %vm394, %v364, 0
        %v405 = vsel %vm394, %v365, 0
        %v408 = vsel %vm394, %v366, 0
        %v411 = vsel %vm394, %v367, 0
        %v414 = vsel %vm394, %v368, 0
        %v417 = vsel %vm394, %v369, 0
        %419 = vmatprep.subr.bf16.mxu0 0
        %420 = vmatpush1.bf16.msra.mxu0 0
        %421 = vmatprep.subr.bf16.mxu0 0
        %422 = vmatpush1.bf16.msra.mxu0 0
        %423 = vmatprep.subr.bf16.mxu0 0
        %424 = vmatpush1.bf16.msra.mxu0 0
        %425 = vmatprep.subr.bf16.mxu0 0
        %426 = vmatpush1.bf16.msra.mxu0 0
        %427 = vmatprep.subr.bf16.mxu0 0
        %428 = vmatpush1.bf16.msra.mxu0 %v389
        %429 = vmatprep.subr.bf16.mxu0 0
        %430 = vmatpush1.bf16.msra.mxu0 %v388
        %431 = vmatprep.subr.bf16.mxu0 0
        %432 = vmatpush1.bf16.msra.mxu0 %v387
        %433 = vmatprep.subr.bf16.mxu0 0
        %434 = vmatpush1.bf16.msra.mxu0 %v386
        %435 = vmatprep.subr.bf16.mxu0 0
        %436 = vmatpush2.bf16.msra.mxu0 0
        %437 = vmatprep.subr.bf16.mxu0 0
        %438 = vmatpush2.bf16.msra.mxu0 0
        %439 = vmatprep.subr.bf16.mxu0 0
        %440 = vmatpush2.bf16.msra.mxu0 0
        %441 = vmatprep.subr.bf16.mxu0 0
        %442 = vmatpush2.bf16.msra.mxu0 0
        %443 = vmatprep.subr.bf16.mxu0 0
        %444 = vmatpush2.bf16.msra.mxu0 0
        %445 = vmatprep.subr.bf16.mxu0 0
        %446 = vmatpush2.bf16.msra.mxu0 0
        %447 = vmatprep.subr.bf16.mxu0 0
        %448 = vmatpush2.bf16.msra.mxu0 0
        %449 = vmatprep.subr.bf16.mxu0 0
        %450 = vmatpush2.bf16.msra.mxu0 0
        %451 = vmatprep.mubr.bf16.mxu0 0
        %452 = vmatmul.mubr.bf16.gmra.mxu0 %v396
        %v453 = vpop.f32.mrf.mxu0
        %v454 = vadd.f32 %v329, %v453
        %v455 = vpop.f32.mrf.mxu0
        %v456 = vpop.f32.mrf.mxu0
        %v457 = vadd.f32 %v329, %v456
        %v458 = vpop.f32.mrf.mxu0
        %459 = vmatprep.mubr.bf16.mxu0 0
        %460 = vmatmul.mubr.bf16.gmra.mxu0 %v399
        %v461 = vpop.f32.mrf.mxu0
        %v462 = vadd.f32 %v329, %v461
        %v463 = vpop.f32.mrf.mxu0
        %v464 = vpop.f32.mrf.mxu0
        %v465 = vadd.f32 %v329, %v464
        %v466 = vpop.f32.mrf.mxu0
        %467 = vmatprep.mubr.bf16.mxu0 0
        %468 = vmatmul.mubr.bf16.gmra.mxu0 %v402
        %v469 = vpop.f32.mrf.mxu0
        %v470 = vadd.f32 %v329, %v469
        %v471 = vpop.f32.mrf.mxu0
        %v472 = vpop.f32.mrf.mxu0
        %v473 = vadd.f32 %v329, %v472
        %v474 = vpop.f32.mrf.mxu0
        %475 = vmatprep.mubr.bf16.mxu0 0
        %476 = vmatmul.mubr.bf16.gmra.mxu0 %v405
        %v477 = vpop.f32.mrf.mxu0
        %v478 = vadd.f32 %v329, %v477
        %v479 = vpop.f32.mrf.mxu0
        %v480 = vpop.f32.mrf.mxu0
        %v481 = vadd.f32 %v329, %v480
        %v482 = vpop.f32.mrf.mxu0
        %483 = vmatprep.mubr.bf16.mxu0 0
        %484 = vmatmul.mubr.bf16.gmra.mxu0 %v408
        %v485 = vpop.f32.mrf.mxu0
        %v486 = vadd.f32 %v329, %v485
        %v487 = vpop.f32.mrf.mxu0
        %v488 = vpop.f32.mrf.mxu0
        %v489 = vadd.f32 %v329, %v488
        %v490 = vpop.f32.mrf.mxu0
        %491 = vmatprep.mubr.bf16.mxu0 0
        %492 = vmatmul.mubr.bf16.gmra.mxu0 %v411
        %v493 = vpop.f32.mrf.mxu0
        %v494 = vadd.f32 %v329, %v493
        %v495 = vpop.f32.mrf.mxu0
        %v496 = vpop.f32.mrf.mxu0
        %v497 = vadd.f32 %v329, %v496
        %v498 = vpop.f32.mrf.mxu0
        %499 = vmatprep.mubr.bf16.mxu0 0
        %500 = vmatmul.mubr.bf16.gmra.mxu0 %v414
        %v501 = vpop.f32.mrf.mxu0
        %v502 = vadd.f32 %v329, %v501
        %v503 = vpop.f32.mrf.mxu0
        %v504 = vpop.f32.mrf.mxu0
        %v505 = vadd.f32 %v329, %v504
        %v506 = vpop.f32.mrf.mxu0
        %507 = vmatprep.mubr.bf16.mxu0 0
        %508 = vmatmul.mubr.bf16.gmra.mxu0 %v417
        %v509 = vpop.f32.mrf.mxu0
        %v510 = vadd.f32 %v329, %v509
        %v511 = vpop.f32.mrf.mxu0
        %v512 = vpop.f32.mrf.mxu0
        %v513 = vadd.f32 %v329, %v512
        %v514 = vpop.f32.mrf.mxu0
        %515 = vdwg.mxu0
        %v516 = vmax.f32 %v454, 0.0
        %v517 = vmax.f32 %v457, 0.0
        %v518 = vmax.f32 %v462, 0.0
        %v519 = vmax.f32 %v465, 0.0
        %v520 = vmax.f32 %v470, 0.0
        %v521 = vmax.f32 %v473, 0.0
        %v522 = vmax.f32 %v478, 0.0
        %v523 = vmax.f32 %v481, 0.0
        %v524 = vmax.f32 %v486, 0.0
        %v525 = vmax.f32 %v489, 0.0
        %v526 = vmax.f32 %v494, 0.0
        %v527 = vmax.f32 %v497, 0.0
        %v528 = vmax.f32 %v502, 0.0
        %v529 = vmax.f32 %v505, 0.0
        %v530 = vmax.f32 %v510, 0.0
        %v531 = vmax.f32 %v513, 0.0
        %v532 = vpack.c.bf16 %v517, %v516
        %v533 = vpack.c.bf16 %v519, %v518
        %v534 = vpack.c.bf16 %v521, %v520
        %v535 = vpack.c.bf16 %v523, %v522
        %v536 = vpack.c.bf16 %v525, %v524
        %v537 = vpack.c.bf16 %v527, %v526
        %v538 = vpack.c.bf16 %v529, %v528
        %v539 = vpack.c.bf16 %v531, %v530
        %v540 = vld [vmem:[%s2] sm:$0xf]
        %v541 = vld [vmem:[%s2 + $0x4] sm:$0xf]
        %v542 = vld [vmem:[%s2 + $0x8] sm:$0xf]
        %v543 = vld [vmem:[%s2 + $0xc] sm:$0xf]
        %v544 = vld [vmem:[%s2 + $0x10] sm:$0xf]
        %v545 = vld [vmem:[%s2 + $0x14] sm:$0xf]
        %v546 = vld [vmem:[%s2 + $0x18] sm:$0xf]
        %v547 = vld [vmem:[%s2 + $0x1c] sm:$0xf]
        %v548 = vld [vmem:[%s6 + $0x1] sm:$0x1]
        %v549 = vlaneseq
        %v550 = vshrl.u32 %v549, 7
        %v551 = vsub.s32 0, %v550
        %v552 = vrot.slane %v548, %v551
        %v561 = vunpack.c.l.b16 %v540
        %v562 = vunpack.c.l.b16 %v541
        %v563 = vunpack.c.l.b16 %v542
        %v564 = vunpack.c.l.b16 %v543
        %v565 = vunpack.c.l.b16 %v544
        %v566 = vunpack.c.l.b16 %v545
        %v567 = vunpack.c.l.b16 %v546
        %v568 = vunpack.c.l.b16 %v547
        %v569 = vpack.c.b16 %v562, %v561
        %v570 = vpack.c.b16 %v564, %v563
        %v571 = vpack.c.b16 %v566, %v565
        %v572 = vpack.c.b16 %v568, %v567
        %v578 = vsel %vm394, %v532, 0
        %v581 = vsel %vm394, %v533, 0
        %v584 = vsel %vm394, %v534, 0
        %v587 = vsel %vm394, %v535, 0
        %v590 = vsel %vm394, %v536, 0
        %v593 = vsel %vm394, %v537, 0
        %v596 = vsel %vm394, %v538, 0
        %v599 = vsel %vm394, %v539, 0
        %601 = vmatprep.subr.bf16.mxu0 0
        %602 = vmatpush1.bf16.msra.mxu0 0
        %603 = vmatprep.subr.bf16.mxu0 0
        %604 = vmatpush1.bf16.msra.mxu0 0
        %605 = vmatprep.subr.bf16.mxu0 0
        %606 = vmatpush1.bf16.msra.mxu0 0
        %607 = vmatprep.subr.bf16.mxu0 0
        %608 = vmatpush1.bf16.msra.mxu0 0
        %609 = vmatprep.subr.bf16.mxu0 0
        %610 = vmatpush1.bf16.msra.mxu0 %v572
        %611 = vmatprep.subr.bf16.mxu0 0
        %612 = vmatpush1.bf16.msra.mxu0 %v571
        %613 = vmatprep.subr.bf16.mxu0 0
        %614 = vmatpush1.bf16.msra.mxu0 %v570
        %615 = vmatprep.subr.bf16.mxu0 0
        %616 = vmatpush1.bf16.msra.mxu0 %v569
        %617 = vmatprep.subr.bf16.mxu0 0
        %618 = vmatpush2.bf16.msra.mxu0 0
        %619 = vmatprep.subr.bf16.mxu0 0
        %620 = vmatpush2.bf16.msra.mxu0 0
        %621 = vmatprep.subr.bf16.mxu0 0
        %622 = vmatpush2.bf16.msra.mxu0 0
        %623 = vmatprep.subr.bf16.mxu0 0
        %624 = vmatpush2.bf16.msra.mxu0 0
        %625 = vmatprep.subr.bf16.mxu0 0
        %626 = vmatpush2.bf16.msra.mxu0 0
        %627 = vmatprep.subr.bf16.mxu0 0
        %628 = vmatpush2.bf16.msra.mxu0 0
        %629 = vmatprep.subr.bf16.mxu0 0
        %630 = vmatpush2.bf16.msra.mxu0 0
        %631 = vmatprep.subr.bf16.mxu0 0
        %632 = vmatpush2.bf16.msra.mxu0 0
        %633 = vmatprep.mubr.bf16.mxu0 0
        %634 = vmatmul.mubr.bf16.gmra.mxu0 %v578
        %v635 = vpop.f32.mrf.mxu0
        %v636 = vadd.f32 %v552, %v635
        %v637 = vpop.f32.mrf.mxu0
        %v638 = vpop.f32.mrf.mxu0
        %v639 = vadd.f32 %v552, %v638
        %v640 = vpop.f32.mrf.mxu0
        %641 = vmatprep.mubr.bf16.mxu0 0
        %642 = vmatmul.mubr.bf16.gmra.mxu0 %v581
        %v643 = vpop.f32.mrf.mxu0
        %v644 = vadd.f32 %v552, %v643
        %v645 = vpop.f32.mrf.mxu0
        %v646 = vpop.f32.mrf.mxu0
        %v647 = vadd.f32 %v552, %v646
        %v648 = vpop.f32.mrf.mxu0
        %649 = vmatprep.mubr.bf16.mxu0 0
        %650 = vmatmul.mubr.bf16.gmra.mxu0 %v584
        %v651 = vpop.f32.mrf.mxu0
        %v652 = vadd.f32 %v552, %v651
        %v653 = vpop.f32.mrf.mxu0
        %v654 = vpop.f32.mrf.mxu0
        %v655 = vadd.f32 %v552, %v654
        %v656 = vpop.f32.mrf.mxu0
        %657 = vmatprep.mubr.bf16.mxu0 0
        %658 = vmatmul.mubr.bf16.gmra.mxu0 %v587
        %v659 = vpop.f32.mrf.mxu0
        %v660 = vadd.f32 %v552, %v659
        %v661 = vpop.f32.mrf.mxu0
        %v662 = vpop.f32.mrf.mxu0
        %v663 = vadd.f32 %v552, %v662
        %v664 = vpop.f32.mrf.mxu0
        %665 = vmatprep.mubr.bf16.mxu0 0
        %666 = vmatmul.mubr.bf16.gmra.mxu0 %v590
        %v667 = vpop.f32.mrf.mxu0
        %v668 = vadd.f32 %v552, %v667
        %v669 = vpop.f32.mrf.mxu0
        %v670 = vpop.f32.mrf.mxu0
        %v671 = vadd.f32 %v552, %v670
        %v672 = vpop.f32.mrf.mxu0
        %673 = vmatprep.mubr.bf16.mxu0 0
        %674 = vmatmul.mubr.bf16.gmra.mxu0 %v593
        %v675 = vpop.f32.mrf.mxu0
        %v676 = vadd.f32 %v552, %v675
        %v677 = vpop.f32.mrf.mxu0
        %v678 = vpop.f32.mrf.mxu0
        %v679 = vadd.f32 %v552, %v678
        %v680 = vpop.f32.mrf.mxu0
        %681 = vmatprep.mubr.bf16.mxu0 0
        %682 = vmatmul.mubr.bf16.gmra.mxu0 %v596
        %v683 = vpop.f32.mrf.mxu0
        %v684 = vadd.f32 %v552, %v683
        %v685 = vpop.f32.mrf.mxu0
        %v686 = vpop.f32.mrf.mxu0
        %v687 = vadd.f32 %v552, %v686
        %v688 = vpop.f32.mrf.mxu0
        %689 = vmatprep.mubr.bf16.mxu0 0
        %690 = vmatmul.mubr.bf16.gmra.mxu0 %v599
        %v691 = vpop.f32.mrf.mxu0
        %v692 = vadd.f32 %v552, %v691
        %v693 = vpop.f32.mrf.mxu0
        %v694 = vpop.f32.mrf.mxu0
        %v695 = vadd.f32 %v552, %v694
        %v696 = vpop.f32.mrf.mxu0
        %697 = vdwg.mxu0
        %v698 = vmax.f32 %v636, 0.0
        %v699 = vmax.f32 %v639, 0.0
        %v700 = vmax.f32 %v644, 0.0
        %v701 = vmax.f32 %v647, 0.0
        %v702 = vmax.f32 %v652, 0.0
        %v703 = vmax.f32 %v655, 0.0
        %v704 = vmax.f32 %v660, 0.0
        %v705 = vmax.f32 %v663, 0.0
        %v706 = vmax.f32 %v668, 0.0
        %v707 = vmax.f32 %v671, 0.0
        %v708 = vmax.f32 %v676, 0.0
        %v709 = vmax.f32 %v679, 0.0
        %v710 = vmax.f32 %v684, 0.0
        %v711 = vmax.f32 %v687, 0.0
        %v712 = vmax.f32 %v692, 0.0
        %v713 = vmax.f32 %v695, 0.0
        %v714 = vpack.c.bf16 %v699, %v698
        %v715 = vpack.c.bf16 %v701, %v700
        %v716 = vpack.c.bf16 %v703, %v702
        %v717 = vpack.c.bf16 %v705, %v704
        %v718 = vpack.c.bf16 %v707, %v706
        %v719 = vpack.c.bf16 %v709, %v708
        %v720 = vpack.c.bf16 %v711, %v710
        %v721 = vpack.c.bf16 %v713, %v712
        %v722 = vld [vmem:[%s3] sm:$0xf]
        %v723 = vld [vmem:[%s3 + $0x4] sm:$0xf]
        %v724 = vld [vmem:[%s3 + $0x8] sm:$0xf]
        %v725 = vld [vmem:[%s3 + $0xc] sm:$0xf]
        %v726 = vld [vmem:[%s3 + $0x10] sm:$0xf]
        %v727 = vld [vmem:[%s3 + $0x14] sm:$0xf]
        %v728 = vld [vmem:[%s3 + $0x18] sm:$0xf]
        %v729 = vld [vmem:[%s3 + $0x1c] sm:$0xf]
        %v730 = vld [vmem:[%s6 + $0x2] sm:$0x1]
        %v731 = vlaneseq
        %v732 = vshrl.u32 %v731, 7
        %v733 = vsub.s32 0, %v732
        %v734 = vrot.slane %v730, %v733
        %v743 = vunpack.c.l.b16 %v722
        %v744 = vunpack.c.l.b16 %v723
        %v745 = vunpack.c.l.b16 %v724
        %v746 = vunpack.c.l.b16 %v725
        %v747 = vunpack.c.l.b16 %v726
        %v748 = vunpack.c.l.b16 %v727
        %v749 = vunpack.c.l.b16 %v728
        %v750 = vunpack.c.l.b16 %v729
        %v751 = vpack.c.b16 %v744, %v743
        %v752 = vpack.c.b16 %v746, %v745
        %v753 = vpack.c.b16 %v748, %v747
        %v754 = vpack.c.b16 %v750, %v749
        %v760 = vsel %vm394, %v714, 0
        %v763 = vsel %vm394, %v715, 0
        %v766 = vsel %vm394, %v716, 0
        %v769 = vsel %vm394, %v717, 0
        %v772 = vsel %vm394, %v718, 0
        %v775 = vsel %vm394, %v719, 0
        %v778 = vsel %vm394, %v720, 0
        %v781 = vsel %vm394, %v721, 0
        %783 = vmatprep.subr.bf16.mxu0 0
        %784 = vmatpush1.bf16.msra.mxu0 0
        %785 = vmatprep.subr.bf16.mxu0 0
        %786 = vmatpush1.bf16.msra.mxu0 0
        %787 = vmatprep.subr.bf16.mxu0 0
        %788 = vmatpush1.bf16.msra.mxu0 0
        %789 = vmatprep.subr.bf16.mxu0 0
        %790 = vmatpush1.bf16.msra.mxu0 0
        %791 = vmatprep.subr.bf16.mxu0 0
        %792 = vmatpush1.bf16.msra.mxu0 %v754
        %793 = vmatprep.subr.bf16.mxu0 0
        %794 = vmatpush1.bf16.msra.mxu0 %v753
        %795 = vmatprep.subr.bf16.mxu0 0
        %796 = vmatpush1.bf16.msra.mxu0 %v752
        %797 = vmatprep.subr.bf16.mxu0 0
        %798 = vmatpush1.bf16.msra.mxu0 %v751
        %799 = vmatprep.subr.bf16.mxu0 0
        %800 = vmatpush2.bf16.msra.mxu0 0
        %801 = vmatprep.subr.bf16.mxu0 0
        %802 = vmatpush2.bf16.msra.mxu0 0
        %803 = vmatprep.subr.bf16.mxu0 0
        %804 = vmatpush2.bf16.msra.mxu0 0
        %805 = vmatprep.subr.bf16.mxu0 0
        %806 = vmatpush2.bf16.msra.mxu0 0
        %807 = vmatprep.subr.bf16.mxu0 0
        %808 = vmatpush2.bf16.msra.mxu0 0
        %809 = vmatprep.subr.bf16.mxu0 0
        %810 = vmatpush2.bf16.msra.mxu0 0
        %811 = vmatprep.subr.bf16.mxu0 0
        %812 = vmatpush2.bf16.msra.mxu0 0
        %813 = vmatprep.subr.bf16.mxu0 0
        %814 = vmatpush2.bf16.msra.mxu0 0
        %815 = vmatprep.mubr.bf16.mxu0 0
        %816 = vmatmul.mubr.bf16.gmra.mxu0 %v760
        %v817 = vpop.f32.mrf.mxu0
        %v818 = vadd.f32 %v734, %v817
        %v819 = vpop.f32.mrf.mxu0
        %v820 = vpop.f32.mrf.mxu0
        %v821 = vadd.f32 %v734, %v820
        %v822 = vpop.f32.mrf.mxu0
        %823 = vmatprep.mubr.bf16.mxu0 0
        %824 = vmatmul.mubr.bf16.gmra.mxu0 %v763
        %v825 = vpop.f32.mrf.mxu0
        %v826 = vadd.f32 %v734, %v825
        %v827 = vpop.f32.mrf.mxu0
        %v828 = vpop.f32.mrf.mxu0
        %v829 = vadd.f32 %v734, %v828
        %v830 = vpop.f32.mrf.mxu0
        %831 = vmatprep.mubr.bf16.mxu0 0
        %832 = vmatmul.mubr.bf16.gmra.mxu0 %v766
        %v833 = vpop.f32.mrf.mxu0
        %v834 = vadd.f32 %v734, %v833
        %v835 = vpop.f32.mrf.mxu0
        %v836 = vpop.f32.mrf.mxu0
        %v837 = vadd.f32 %v734, %v836
        %v838 = vpop.f32.mrf.mxu0
        %839 = vmatprep.mubr.bf16.mxu0 0
        %840 = vmatmul.mubr.bf16.gmra.mxu0 %v769
        %v841 = vpop.f32.mrf.mxu0
        %v842 = vadd.f32 %v734, %v841
        %v843 = vpop.f32.mrf.mxu0
        %v844 = vpop.f32.mrf.mxu0
        %v845 = vadd.f32 %v734, %v844
        %v846 = vpop.f32.mrf.mxu0
        %847 = vmatprep.mubr.bf16.mxu0 0
        %848 = vmatmul.mubr.bf16.gmra.mxu0 %v772
        %v849 = vpop.f32.mrf.mxu0
        %v850 = vadd.f32 %v734, %v849
        %v851 = vpop.f32.mrf.mxu0
        %v852 = vpop.f32.mrf.mxu0
        %v853 = vadd.f32 %v734, %v852
        %v854 = vpop.f32.mrf.mxu0
        %855 = vmatprep.mubr.bf16.mxu0 0
        %856 = vmatmul.mubr.bf16.gmra.mxu0 %v775
        %v857 = vpop.f32.mrf.mxu0
        %v858 = vadd.f32 %v734, %v857
        %v859 = vpop.f32.mrf.mxu0
        %v860 = vpop.f32.mrf.mxu0
        %v861 = vadd.f32 %v734, %v860
        %v862 = vpop.f32.mrf.mxu0
        %863 = vmatprep.mubr.bf16.mxu0 0
        %864 = vmatmul.mubr.bf16.gmra.mxu0 %v778
        %v865 = vpop.f32.mrf.mxu0
        %v866 = vadd.f32 %v734, %v865
        %v867 = vpop.f32.mrf.mxu0
        %v868 = vpop.f32.mrf.mxu0
        %v869 = vadd.f32 %v734, %v868
        %v870 = vpop.f32.mrf.mxu0
        %871 = vmatprep.mubr.bf16.mxu0 0
        %872 = vmatmul.mubr.bf16.gmra.mxu0 %v781
        %v873 = vpop.f32.mrf.mxu0
        %v874 = vadd.f32 %v734, %v873
        %v875 = vpop.f32.mrf.mxu0
        %v876 = vpop.f32.mrf.mxu0
        %v877 = vadd.f32 %v734, %v876
        %v878 = vpop.f32.mrf.mxu0
        %879 = vdwg.mxu0
        %v880 = vmax.f32 %v818, 0.0
        %v881 = vmax.f32 %v821, 0.0
        %v882 = vmax.f32 %v826, 0.0
        %v883 = vmax.f32 %v829, 0.0
        %v884 = vmax.f32 %v834, 0.0
        %v885 = vmax.f32 %v837, 0.0
        %v886 = vmax.f32 %v842, 0.0
        %v887 = vmax.f32 %v845, 0.0
        %v888 = vmax.f32 %v850, 0.0
        %v889 = vmax.f32 %v853, 0.0
        %v890 = vmax.f32 %v858, 0.0
        %v891 = vmax.f32 %v861, 0.0
        %v892 = vmax.f32 %v866, 0.0
        %v893 = vmax.f32 %v869, 0.0
        %v894 = vmax.f32 %v874, 0.0
        %v895 = vmax.f32 %v877, 0.0
        %v896 = vpack.c.bf16 %v881, %v880
        %v897 = vpack.c.bf16 %v883, %v882
        %v898 = vpack.c.bf16 %v885, %v884
        %v899 = vpack.c.bf16 %v887, %v886
        %v900 = vpack.c.bf16 %v889, %v888
        %v901 = vpack.c.bf16 %v891, %v890
        %v902 = vpack.c.bf16 %v893, %v892
        %v903 = vpack.c.bf16 %v895, %v894
        %v904 = vld [vmem:[%s4] sm:$0xf]
        %v905 = vld [vmem:[%s4 + $0x4] sm:$0xf]
        %v906 = vld [vmem:[%s4 + $0x8] sm:$0xf]
        %v907 = vld [vmem:[%s4 + $0xc] sm:$0xf]
        %v908 = vld [vmem:[%s4 + $0x10] sm:$0xf]
        %v909 = vld [vmem:[%s4 + $0x14] sm:$0xf]
        %v910 = vld [vmem:[%s4 + $0x18] sm:$0xf]
        %v911 = vld [vmem:[%s4 + $0x1c] sm:$0xf]
        %v912 = vld [vmem:[%s6 + $0x3] sm:$0x1]
        %v913 = vlaneseq
        %v914 = vshrl.u32 %v913, 7
        %v915 = vsub.s32 0, %v914
        %v916 = vrot.slane %v912, %v915
        %v925 = vunpack.c.l.b16 %v904
        %v926 = vunpack.c.l.b16 %v905
        %v927 = vunpack.c.l.b16 %v906
        %v928 = vunpack.c.l.b16 %v907
        %v929 = vunpack.c.l.b16 %v908
        %v930 = vunpack.c.l.b16 %v909
        %v931 = vunpack.c.l.b16 %v910
        %v932 = vunpack.c.l.b16 %v911
        %v933 = vpack.c.b16 %v926, %v925
        %v934 = vpack.c.b16 %v928, %v927
        %v935 = vpack.c.b16 %v930, %v929
        %v936 = vpack.c.b16 %v932, %v931
        %v942 = vsel %vm394, %v896, 0
        %v945 = vsel %vm394, %v897, 0
        %v948 = vsel %vm394, %v898, 0
        %v951 = vsel %vm394, %v899, 0
        %v954 = vsel %vm394, %v900, 0
        %v957 = vsel %vm394, %v901, 0
        %v960 = vsel %vm394, %v902, 0
        %v963 = vsel %vm394, %v903, 0
        %965 = vmatprep.subr.bf16.mxu0 0
        %966 = vmatpush1.bf16.msra.mxu0 0
        %967 = vmatprep.subr.bf16.mxu0 0
        %968 = vmatpush1.bf16.msra.mxu0 0
        %969 = vmatprep.subr.bf16.mxu0 0
        %970 = vmatpush1.bf16.msra.mxu0 0
        %971 = vmatprep.subr.bf16.mxu0 0
        %972 = vmatpush1.bf16.msra.mxu0 0
        %973 = vmatprep.subr.bf16.mxu0 0
        %974 = vmatpush1.bf16.msra.mxu0 %v936
        %975 = vmatprep.subr.bf16.mxu0 0
        %976 = vmatpush1.bf16.msra.mxu0 %v935
        %977 = vmatprep.subr.bf16.mxu0 0
        %978 = vmatpush1.bf16.msra.mxu0 %v934
        %979 = vmatprep.subr.bf16.mxu0 0
        %980 = vmatpush1.bf16.msra.mxu0 %v933
        %981 = vmatprep.subr.bf16.mxu0 0
        %982 = vmatpush2.bf16.msra.mxu0 0
        %983 = vmatprep.subr.bf16.mxu0 0
        %984 = vmatpush2.bf16.msra.mxu0 0
        %985 = vmatprep.subr.bf16.mxu0 0
        %986 = vmatpush2.bf16.msra.mxu0 0
        %987 = vmatprep.subr.bf16.mxu0 0
        %988 = vmatpush2.bf16.msra.mxu0 0
        %989 = vmatprep.subr.bf16.mxu0 0
        %990 = vmatpush2.bf16.msra.mxu0 0
        %991 = vmatprep.subr.bf16.mxu0 0
        %992 = vmatpush2.bf16.msra.mxu0 0
        %993 = vmatprep.subr.bf16.mxu0 0
        %994 = vmatpush2.bf16.msra.mxu0 0
        %995 = vmatprep.subr.bf16.mxu0 0
        %996 = vmatpush2.bf16.msra.mxu0 0
        %997 = vmatprep.mubr.bf16.mxu0 0
        %998 = vmatmul.mubr.bf16.gmra.mxu0 %v942
        %v999 = vpop.f32.mrf.mxu0
        %v1000 = vadd.f32 %v916, %v999
        %v1001 = vpop.f32.mrf.mxu0
        %v1002 = vpop.f32.mrf.mxu0
        %v1003 = vadd.f32 %v916, %v1002
        %v1004 = vpop.f32.mrf.mxu0
        %1005 = vmatprep.mubr.bf16.mxu0 0
        %1006 = vmatmul.mubr.bf16.gmra.mxu0 %v945
        %v1007 = vpop.f32.mrf.mxu0
        %v1008 = vadd.f32 %v916, %v1007
        %v1009 = vpop.f32.mrf.mxu0
        %v1010 = vpop.f32.mrf.mxu0
        %v1011 = vadd.f32 %v916, %v1010
        %v1012 = vpop.f32.mrf.mxu0
        %1013 = vmatprep.mubr.bf16.mxu0 0
        %1014 = vmatmul.mubr.bf16.gmra.mxu0 %v948
        %v1015 = vpop.f32.mrf.mxu0
        %v1016 = vadd.f32 %v916, %v1015
        %v1017 = vpop.f32.mrf.mxu0
        %v1018 = vpop.f32.mrf.mxu0
        %v1019 = vadd.f32 %v916, %v1018
        %v1020 = vpop.f32.mrf.mxu0
        %1021 = vmatprep.mubr.bf16.mxu0 0
        %1022 = vmatmul.mubr.bf16.gmra.mxu0 %v951
        %v1023 = vpop.f32.mrf.mxu0
        %v1024 = vadd.f32 %v916, %v1023
        %v1025 = vpop.f32.mrf.mxu0
        %v1026 = vpop.f32.mrf.mxu0
        %v1027 = vadd.f32 %v916, %v1026
        %v1028 = vpop.f32.mrf.mxu0
        %1029 = vmatprep.mubr.bf16.mxu0 0
        %1030 = vmatmul.mubr.bf16.gmra.mxu0 %v954
        %v1031 = vpop.f32.mrf.mxu0
        %v1032 = vadd.f32 %v916, %v1031
        %v1033 = vpop.f32.mrf.mxu0
        %v1034 = vpop.f32.mrf.mxu0
        %v1035 = vadd.f32 %v916, %v1034
        %v1036 = vpop.f32.mrf.mxu0
        %1037 = vmatprep.mubr.bf16.mxu0 0
        %1038 = vmatmul.mubr.bf16.gmra.mxu0 %v957
        %v1039 = vpop.f32.mrf.mxu0
        %v1040 = vadd.f32 %v916, %v1039
        %v1041 = vpop.f32.mrf.mxu0
        %v1042 = vpop.f32.mrf.mxu0
        %v1043 = vadd.f32 %v916, %v1042
        %v1044 = vpop.f32.mrf.mxu0
        %1045 = vmatprep.mubr.bf16.mxu0 0
        %1046 = vmatmul.mubr.bf16.gmra.mxu0 %v960
        %v1047 = vpop.f32.mrf.mxu0
        %v1048 = vadd.f32 %v916, %v1047
        %v1049 = vpop.f32.mrf.mxu0
        %v1050 = vpop.f32.mrf.mxu0
        %v1051 = vadd.f32 %v916, %v1050
        %v1052 = vpop.f32.mrf.mxu0
        %1053 = vmatprep.mubr.bf16.mxu0 0
        %1054 = vmatmul.mubr.bf16.gmra.mxu0 %v963
        %v1055 = vpop.f32.mrf.mxu0
        %v1056 = vadd.f32 %v916, %v1055
        %v1057 = vpop.f32.mrf.mxu0
        %v1058 = vpop.f32.mrf.mxu0
        %v1059 = vadd.f32 %v916, %v1058
        %v1060 = vpop.f32.mrf.mxu0
        %1061 = vdwg.mxu0
        %v1062 = vmax.f32 %v1000, 0.0
        %v1063 = vmax.f32 %v1003, 0.0
        %v1064 = vmax.f32 %v1008, 0.0
        %v1065 = vmax.f32 %v1011, 0.0
        %v1066 = vmax.f32 %v1016, 0.0
        %v1067 = vmax.f32 %v1019, 0.0
        %v1068 = vmax.f32 %v1024, 0.0
        %v1069 = vmax.f32 %v1027, 0.0
        %v1070 = vmax.f32 %v1032, 0.0
        %v1071 = vmax.f32 %v1035, 0.0
        %v1072 = vmax.f32 %v1040, 0.0
        %v1073 = vmax.f32 %v1043, 0.0
        %v1074 = vmax.f32 %v1048, 0.0
        %v1075 = vmax.f32 %v1051, 0.0
        %v1076 = vmax.f32 %v1056, 0.0
        %v1077 = vmax.f32 %v1059, 0.0
        %v1078 = vpack.c.bf16 %v1063, %v1062
        %v1079 = vpack.c.bf16 %v1065, %v1064
        %v1080 = vpack.c.bf16 %v1067, %v1066
        %v1081 = vpack.c.bf16 %v1069, %v1068
        %v1082 = vpack.c.bf16 %v1071, %v1070
        %v1083 = vpack.c.bf16 %v1073, %v1072
        %v1084 = vpack.c.bf16 %v1075, %v1074
        %v1085 = vpack.c.bf16 %v1077, %v1076
        %v1086 = vld [vmem:[%s5] sm:$0xf]
        %v1087 = vld [vmem:[%s5 + $0x4] sm:$0xf]
        %v1088 = vld [vmem:[%s5 + $0x8] sm:$0xf]
        %v1089 = vld [vmem:[%s5 + $0xc] sm:$0xf]
        %v1090 = vld [vmem:[%s5 + $0x10] sm:$0xf]
        %v1091 = vld [vmem:[%s5 + $0x14] sm:$0xf]
        %v1092 = vld [vmem:[%s5 + $0x18] sm:$0xf]
        %v1093 = vld [vmem:[%s5 + $0x1c] sm:$0xf]
        %v1094 = vld [vmem:[%s6 + $0x4] sm:$0x1]
        %v1095 = vlaneseq
        %v1096 = vshrl.u32 %v1095, 7
        %v1097 = vsub.s32 0, %v1096
        %v1098 = vrot.slane %v1094, %v1097
        %v1107 = vunpack.c.l.b16 %v1086
        %v1108 = vunpack.c.l.b16 %v1087
        %v1109 = vunpack.c.l.b16 %v1088
        %v1110 = vunpack.c.l.b16 %v1089
        %v1111 = vunpack.c.l.b16 %v1090
        %v1112 = vunpack.c.l.b16 %v1091
        %v1113 = vunpack.c.l.b16 %v1092
        %v1114 = vunpack.c.l.b16 %v1093
        %v1115 = vpack.c.b16 %v1108, %v1107
        %v1116 = vpack.c.b16 %v1110, %v1109
        %v1117 = vpack.c.b16 %v1112, %v1111
        %v1118 = vpack.c.b16 %v1114, %v1113
        %v1124 = vsel %vm394, %v1078, 0
        %v1127 = vsel %vm394, %v1079, 0
        %v1130 = vsel %vm394, %v1080, 0
        %v1133 = vsel %vm394, %v1081, 0
        %v1136 = vsel %vm394, %v1082, 0
        %v1139 = vsel %vm394, %v1083, 0
        %v1142 = vsel %vm394, %v1084, 0
        %v1145 = vsel %vm394, %v1085, 0
        %1147 = vmatprep.subr.bf16.mxu0 0
        %1148 = vmatpush1.bf16.msra.mxu0 0
        %1149 = vmatprep.subr.bf16.mxu0 0
        %1150 = vmatpush1.bf16.msra.mxu0 0
        %1151 = vmatprep.subr.bf16.mxu0 0
        %1152 = vmatpush1.bf16.msra.mxu0 0
        %1153 = vmatprep.subr.bf16.mxu0 0
        %1154 = vmatpush1.bf16.msra.mxu0 0
        %1155 = vmatprep.subr.bf16.mxu0 0
        %1156 = vmatpush1.bf16.msra.mxu0 %v1118
        %1157 = vmatprep.subr.bf16.mxu0 0
        %1158 = vmatpush1.bf16.msra.mxu0 %v1117
        %1159 = vmatprep.subr.bf16.mxu0 0
        %1160 = vmatpush1.bf16.msra.mxu0 %v1116
        %1161 = vmatprep.subr.bf16.mxu0 0
        %1162 = vmatpush1.bf16.msra.mxu0 %v1115
        %1163 = vmatprep.subr.bf16.mxu0 0
        %1164 = vmatpush2.bf16.msra.mxu0 0
        %1165 = vmatprep.subr.bf16.mxu0 0
        %1166 = vmatpush2.bf16.msra.mxu0 0
        %1167 = vmatprep.subr.bf16.mxu0 0
        %1168 = vmatpush2.bf16.msra.mxu0 0
        %1169 = vmatprep.subr.bf16.mxu0 0
        %1170 = vmatpush2.bf16.msra.mxu0 0
        %1171 = vmatprep.subr.bf16.mxu0 0
        %1172 = vmatpush2.bf16.msra.mxu0 0
        %1173 = vmatprep.subr.bf16.mxu0 0
        %1174 = vmatpush2.bf16.msra.mxu0 0
        %1175 = vmatprep.subr.bf16.mxu0 0
        %1176 = vmatpush2.bf16.msra.mxu0 0
        %1177 = vmatprep.subr.bf16.mxu0 0
        %1178 = vmatpush2.bf16.msra.mxu0 0
        %1179 = vmatprep.mubr.bf16.mxu0 0
        %1180 = vmatmul.mubr.bf16.gmra.mxu0 %v1124
        %v1181 = vpop.f32.mrf.mxu0
        %v1182 = vadd.f32 %v1098, %v1181
        %v1183 = vpop.f32.mrf.mxu0
        %v1184 = vpop.f32.mrf.mxu0
        %v1185 = vadd.f32 %v1098, %v1184
        %v1186 = vpop.f32.mrf.mxu0
        %1187 = vmatprep.mubr.bf16.mxu0 0
        %1188 = vmatmul.mubr.bf16.gmra.mxu0 %v1127
        %v1189 = vpop.f32.mrf.mxu0
        %v1190 = vadd.f32 %v1098, %v1189
        %v1191 = vpop.f32.mrf.mxu0
        %v1192 = vpop.f32.mrf.mxu0
        %v1193 = vadd.f32 %v1098, %v1192
        %v1194 = vpop.f32.mrf.mxu0
        %1195 = vmatprep.mubr.bf16.mxu0 0
        %1196 = vmatmul.mubr.bf16.gmra.mxu0 %v1130
        %v1197 = vpop.f32.mrf.mxu0
        %v1198 = vadd.f32 %v1098, %v1197
        %v1199 = vpop.f32.mrf.mxu0
        %v1200 = vpop.f32.mrf.mxu0
        %v1201 = vadd.f32 %v1098, %v1200
        %v1202 = vpop.f32.mrf.mxu0
        %1203 = vmatprep.mubr.bf16.mxu0 0
        %1204 = vmatmul.mubr.bf16.gmra.mxu0 %v1133
        %v1205 = vpop.f32.mrf.mxu0
        %v1206 = vadd.f32 %v1098, %v1205
        %v1207 = vpop.f32.mrf.mxu0
        %v1208 = vpop.f32.mrf.mxu0
        %v1209 = vadd.f32 %v1098, %v1208
        %v1210 = vpop.f32.mrf.mxu0
        %1211 = vmatprep.mubr.bf16.mxu0 0
        %1212 = vmatmul.mubr.bf16.gmra.mxu0 %v1136
        %v1213 = vpop.f32.mrf.mxu0
        %v1214 = vadd.f32 %v1098, %v1213
        %v1215 = vpop.f32.mrf.mxu0
        %v1216 = vpop.f32.mrf.mxu0
        %v1217 = vadd.f32 %v1098, %v1216
        %v1218 = vpop.f32.mrf.mxu0
        %1219 = vmatprep.mubr.bf16.mxu0 0
        %1220 = vmatmul.mubr.bf16.gmra.mxu0 %v1139
        %v1221 = vpop.f32.mrf.mxu0
        %v1222 = vadd.f32 %v1098, %v1221
        %v1223 = vpop.f32.mrf.mxu0
        %v1224 = vpop.f32.mrf.mxu0
        %v1225 = vadd.f32 %v1098, %v1224
        %v1226 = vpop.f32.mrf.mxu0
        %1227 = vmatprep.mubr.bf16.mxu0 0
        %1228 = vmatmul.mubr.bf16.gmra.mxu0 %v1142
        %v1229 = vpop.f32.mrf.mxu0
        %v1230 = vadd.f32 %v1098, %v1229
        %v1231 = vpop.f32.mrf.mxu0
        %v1232 = vpop.f32.mrf.mxu0
        %v1233 = vadd.f32 %v1098, %v1232
        %v1234 = vpop.f32.mrf.mxu0
        %1235 = vmatprep.mubr.bf16.mxu0 0
        %1236 = vmatmul.mubr.bf16.gmra.mxu0 %v1145
        %v1237 = vpop.f32.mrf.mxu0
        %v1238 = vadd.f32 %v1098, %v1237
        %v1239 = vpop.f32.mrf.mxu0
        %v1240 = vpop.f32.mrf.mxu0
        %v1241 = vadd.f32 %v1098, %v1240
        %v1242 = vpop.f32.mrf.mxu0
        %1243 = vdwg.mxu0
        %1244 = vst.msk [vmem:[%s280] sm:$0xff] %vm394, %v1182
        %1245 = vst.msk [vmem:[%s280 + $0x8] sm:$0xff] %vm394, %v1185
        %1246 = vst.msk [vmem:[%s280 + $0x10] sm:$0xff] %vm394, %v1190
        %1247 = vst.msk [vmem:[%s280 + $0x18] sm:$0xff] %vm394, %v1193
        %1248 = vst.msk [vmem:[%s280 + $0x20] sm:$0xff] %vm394, %v1198
        %1249 = vst.msk [vmem:[%s280 + $0x28] sm:$0xff] %vm394, %v1201
        %1250 = vst.msk [vmem:[%s280 + $0x30] sm:$0xff] %vm394, %v1206
        %1251 = vst.msk [vmem:[%s280 + $0x38] sm:$0xff] %vm394, %v1209
        %1252 = vst.msk [vmem:[%s280 + $0x40] sm:$0xff] %vm394, %v1214
        %1253 = vst.msk [vmem:[%s280 + $0x48] sm:$0xff] %vm394, %v1217
        %1254 = vst.msk [vmem:[%s280 + $0x50] sm:$0xff] %vm394, %v1222
        %1255 = vst.msk [vmem:[%s280 + $0x58] sm:$0xff] %vm394, %v1225
        %1256 = vst.msk [vmem:[%s280 + $0x60] sm:$0xff] %vm394, %v1230
        %1257 = vst.msk [vmem:[%s280 + $0x68] sm:$0xff] %vm394, %v1233
        %1258 = vst.msk [vmem:[%s280 + $0x70] sm:$0xff] %vm394, %v1238
        %1259 = vst.msk [vmem:[%s280 + $0x78] sm:$0xff] %vm394, %v1241
        %s1260 = sand.u32 %s178, 1
        %s1261 = sand.u32 %s178, 1
        %s1262 = smul.addr %s1261, 128
        %s1263 = scalar_lea.vmem [#allocation2], %s1262
        // Predicated region
        $region49: #{autoencoder_forward.1} parent=47 // pred_check
          %p1264 = pneg %p188
        $region50: #{autoencoder_forward.1} parent=47 // pred_check_branch
          %1266 = sbr.rel (%p1264) target = $region52
        $region51: #{autoencoder_forward.1} parent=47 // pred_region
          %s1267 = smul.u32 16, %s18
          %s1268 = ssub.s32 63, %s1267
          %p1269 = scmp.lt.s32.totalorder %s1268, 16
          %s1270 = scalar_select %p1269, %s1268, 16
          %s1271 = smul.u32 128, %s1270
          %p1272 = scmp.ne.s32.totalorder 0, %s1271
          %s1273 = smul.addr %s1267, 8
          %s1274 = scalar_lea.vmem %s7, %s1273
          // Predicated region
          $region53: #{autoencoder_forward.1} parent=51 // pred_check
            %p1275 = pneg %p1272
          $region54: #{autoencoder_forward.1} parent=51 // pred_check_branch
            %1277 = sbr.rel (%p1275) target = $region56
          $region55: #{autoencoder_forward.1} parent=51 // pred_region
            // Predicated region
            $region57: #{autoencoder_forward.1} parent=55 // pred_check
              _
            $region58: #{autoencoder_forward.1} parent=55 // pred_check_branch
              %1279 = sbr.rel (0) target = $region60
            $region59: #{autoencoder_forward.1} parent=55 // pred_region
              // Predicated region
              $region79: #{autoencoder_forward.1} parent=59 // pred_check
                _
              $region80: #{autoencoder_forward.1} parent=59 // pred_check_branch
                %1359 = sbr.rel (0) target = $region82
              $region81: #{autoencoder_forward.1} parent=59 // pred_region
                %s1360 = sshrl.u32 %s1270, 4
                // While loop
                $region83: #{autoencoder_forward.1} parent=81 // loop_pre_header
                  _
                $region84: #{autoencoder_forward.1} parent=81 // loop_header
                  %s1362 = sphi 0, %s1364
                  %p1363 = scmp.ge.s32.totalorder %s1362, %s1360
                  %s1367 = sphi 0, %s1404
                  %s1368 = sphi %s1263, %s1407
                  %s1369 = sphi %s1274, %s1408
                $region85: #{autoencoder_forward.1} parent=81 // loop_header_branch
                  %1366 = sbr.rel (%p1363) target = $region89
                $region86: #{autoencoder_forward.1} parent=81 // loop_body
                  %v1370 = vld [vmem:[%s1368] sm:$0xff]
                  %1371 = vst [vmem:[%s1369] sm:$0xff] %v1370
                  %v1372 = vld [vmem:[%s1368 + $0x8] sm:$0xff]
                  %1373 = vst [vmem:[%s1369 + $0x8] sm:$0xff] %v1372
                  %v1374 = vld [vmem:[%s1368 + $0x10] sm:$0xff]
                  %1375 = vst [vmem:[%s1369 + $0x10] sm:$0xff] %v1374
                  %v1376 = vld [vmem:[%s1368 + $0x18] sm:$0xff]
                  %1377 = vst [vmem:[%s1369 + $0x18] sm:$0xff] %v1376
                  %v1378 = vld [vmem:[%s1368 + $0x20] sm:$0xff]
                  %1379 = vst [vmem:[%s1369 + $0x20] sm:$0xff] %v1378
                  %v1380 = vld [vmem:[%s1368 + $0x28] sm:$0xff]
                  %1381 = vst [vmem:[%s1369 + $0x28] sm:$0xff] %v1380
                  %v1382 = vld [vmem:[%s1368 + $0x30] sm:$0xff]
                  %1383 = vst [vmem:[%s1369 + $0x30] sm:$0xff] %v1382
                  %v1384 = vld [vmem:[%s1368 + $0x38] sm:$0xff]
                  %1385 = vst [vmem:[%s1369 + $0x38] sm:$0xff] %v1384
                  %v1386 = vld [vmem:[%s1368 + $0x40] sm:$0xff]
                  %1387 = vst [vmem:[%s1369 + $0x40] sm:$0xff] %v1386
                  %v1388 = vld [vmem:[%s1368 + $0x48] sm:$0xff]
                  %1389 = vst [vmem:[%s1369 + $0x48] sm:$0xff] %v1388
                  %v1390 = vld [vmem:[%s1368 + $0x50] sm:$0xff]
                  %1391 = vst [vmem:[%s1369 + $0x50] sm:$0xff] %v1390
                  %v1392 = vld [vmem:[%s1368 + $0x58] sm:$0xff]
                  %1393 = vst [vmem:[%s1369 + $0x58] sm:$0xff] %v1392
                  %v1394 = vld [vmem:[%s1368 + $0x60] sm:$0xff]
                  %1395 = vst [vmem:[%s1369 + $0x60] sm:$0xff] %v1394
                  %v1396 = vld [vmem:[%s1368 + $0x68] sm:$0xff]
                  %1397 = vst [vmem:[%s1369 + $0x68] sm:$0xff] %v1396
                  %v1398 = vld [vmem:[%s1368 + $0x70] sm:$0xff]
                  %1399 = vst [vmem:[%s1369 + $0x70] sm:$0xff] %v1398
                  %v1400 = vld [vmem:[%s1368 + $0x78] sm:$0xff]
                  %1401 = vst [vmem:[%s1369 + $0x78] sm:$0xff] %v1400
                  %s1402 = sadd.s32 1, %s1367
                  %p1403 = scmp.ge.s32.totalorder %s1402, %s1360
                  %s1404 = scalar_select %p1403, 0, %s1402
                  %s1405 = smul.u32 %s1404, 128
                  %s1406 = smul.u32 %s1404, 128
                  %s1407 = scalar_lea.vmem %s1263, %s1405 [#allocation2]
                  %s1408 = scalar_lea.vmem %s1274, %s1406
                $region87: #{autoencoder_forward.1} parent=81 // loop_footer
                  %s1364 = sadd.s32 %s1362, 1
                $region88: #{autoencoder_forward.1} parent=81 // loop_footer_branch
                  %1361 = sbr.rel target = $region84
                $region89: #{autoencoder_forward.1} parent=81 // loop_exit
                  _
                %s1409 = sshrl.u32 %s1270, 4
                %s1410 = sand.u32 %s1270, 15
                %s1411 = smul.u32 %s1409, 16
                %s1412 = smul.u32 8, %s1411
                %s1413 = scalar_lea.vmem %s1263, %s1412 [#allocation2]
                %s1414 = smul.u32 8, %s1411
                %s1415 = scalar_lea.vmem %s1274, %s1414
                // While loop
                $region90: #{autoencoder_forward.1} parent=81 // loop_pre_header
                  _
                $region91: #{autoencoder_forward.1} parent=81 // loop_header
                  %s1417 = sphi 0, %s1419
                  %p1418 = scmp.ge.s32.totalorder %s1417, %s1410
                  %s1422 = sphi 0, %s1429
                  %s1423 = sphi %s1413, %s1432
                  %s1424 = sphi %s1415, %s1433
                $region92: #{autoencoder_forward.1} parent=81 // loop_header_branch
                  %1421 = sbr.rel (%p1418) target = $region96
                $region93: #{autoencoder_forward.1} parent=81 // loop_body
                  %v1425 = vld [vmem:[%s1423] sm:$0xff]
                  %1426 = vst [vmem:[%s1424] sm:$0xff] %v1425
                  %s1427 = sadd.s32 1, %s1422
                  %p1428 = scmp.ge.s32.totalorder %s1427, %s1410
                  %s1429 = scalar_select %p1428, 0, %s1427
                  %s1430 = smul.u32 %s1429, 8
                  %s1431 = smul.u32 %s1429, 8
                  %s1432 = scalar_lea.vmem %s1413, %s1430 [#allocation2]
                  %s1433 = scalar_lea.vmem %s1415, %s1431
                $region94: #{autoencoder_forward.1} parent=81 // loop_footer
                  %s1419 = sadd.s32 %s1417, 1
                $region95: #{autoencoder_forward.1} parent=81 // loop_footer_branch
                  %1416 = sbr.rel target = $region91
                $region96: #{autoencoder_forward.1} parent=81 // loop_exit
                  _
              $region82: #{autoencoder_forward.1} parent=59 // pred_fallthru
                _
              // Predicated region
              $region97: #{autoencoder_forward.1} parent=59 // pred_check
                _
              $region98: #{autoencoder_forward.1} parent=59 // pred_check_branch
                %1435 = sbr.rel target = $region100
              $region99: #{autoencoder_forward.1} parent=59 // pred_region
                _
              $region100: #{autoencoder_forward.1} parent=59 // pred_fallthru
                _
            $region60: #{autoencoder_forward.1} parent=55 // pred_fallthru
              _
            // Predicated region
            $region61: #{autoencoder_forward.1} parent=55 // pred_check
              _
            $region62: #{autoencoder_forward.1} parent=55 // pred_check_branch
              %1281 = sbr.rel target = $region64
            $region63: #{autoencoder_forward.1} parent=55 // pred_region
              %s1283 = ssub.s32 256, 1
              %s1284 = sshrl.u32 %s1270, 4
              // While loop
              $region65: #{autoencoder_forward.1} parent=63 // loop_pre_header
                _
              $region66: #{autoencoder_forward.1} parent=63 // loop_header
                %s1286 = sphi 0, %s1288
                %p1287 = scmp.ge.s32.totalorder %s1286, %s1284
                %s1291 = sphi 0, %s1328
                %s1292 = sphi %s1263, %s1331
                %s1293 = sphi %s1274, %s1332
              $region67: #{autoencoder_forward.1} parent=63 // loop_header_branch
                %1290 = sbr.rel (%p1287) target = $region71
              $region68: #{autoencoder_forward.1} parent=63 // loop_body
                %v1294 = vld [vmem:[%s1292] sm:%s1283]
                %1295 = vst [vmem:[%s1293] sm:%s1283] %v1294
                %v1296 = vld [vmem:[%s1292 + $0x8] sm:%s1283]
                %1297 = vst [vmem:[%s1293 + $0x8] sm:%s1283] %v1296
                %v1298 = vld [vmem:[%s1292 + $0x10] sm:%s1283]
                %1299 = vst [vmem:[%s1293 + $0x10] sm:%s1283] %v1298
                %v1300 = vld [vmem:[%s1292 + $0x18] sm:%s1283]
                %1301 = vst [vmem:[%s1293 + $0x18] sm:%s1283] %v1300
                %v1302 = vld [vmem:[%s1292 + $0x20] sm:%s1283]
                %1303 = vst [vmem:[%s1293 + $0x20] sm:%s1283] %v1302
                %v1304 = vld [vmem:[%s1292 + $0x28] sm:%s1283]
                %1305 = vst [vmem:[%s1293 + $0x28] sm:%s1283] %v1304
                %v1306 = vld [vmem:[%s1292 + $0x30] sm:%s1283]
                %1307 = vst [vmem:[%s1293 + $0x30] sm:%s1283] %v1306
                %v1308 = vld [vmem:[%s1292 + $0x38] sm:%s1283]
                %1309 = vst [vmem:[%s1293 + $0x38] sm:%s1283] %v1308
                %v1310 = vld [vmem:[%s1292 + $0x40] sm:%s1283]
                %1311 = vst [vmem:[%s1293 + $0x40] sm:%s1283] %v1310
                %v1312 = vld [vmem:[%s1292 + $0x48] sm:%s1283]
                %1313 = vst [vmem:[%s1293 + $0x48] sm:%s1283] %v1312
                %v1314 = vld [vmem:[%s1292 + $0x50] sm:%s1283]
                %1315 = vst [vmem:[%s1293 + $0x50] sm:%s1283] %v1314
                %v1316 = vld [vmem:[%s1292 + $0x58] sm:%s1283]
                %1317 = vst [vmem:[%s1293 + $0x58] sm:%s1283] %v1316
                %v1318 = vld [vmem:[%s1292 + $0x60] sm:%s1283]
                %1319 = vst [vmem:[%s1293 + $0x60] sm:%s1283] %v1318
                %v1320 = vld [vmem:[%s1292 + $0x68] sm:%s1283]
                %1321 = vst [vmem:[%s1293 + $0x68] sm:%s1283] %v1320
                %v1322 = vld [vmem:[%s1292 + $0x70] sm:%s1283]
                %1323 = vst [vmem:[%s1293 + $0x70] sm:%s1283] %v1322
                %v1324 = vld [vmem:[%s1292 + $0x78] sm:%s1283]
                %1325 = vst [vmem:[%s1293 + $0x78] sm:%s1283] %v1324
                %s1326 = sadd.s32 1, %s1291
                %p1327 = scmp.ge.s32.totalorder %s1326, %s1284
                %s1328 = scalar_select %p1327, 0, %s1326
                %s1329 = smul.u32 %s1328, 128
                %s1330 = smul.u32 %s1328, 128
                %s1331 = scalar_lea.vmem %s1263, %s1329 [#allocation2]
                %s1332 = scalar_lea.vmem %s1274, %s1330
              $region69: #{autoencoder_forward.1} parent=63 // loop_footer
                %s1288 = sadd.s32 %s1286, 1
              $region70: #{autoencoder_forward.1} parent=63 // loop_footer_branch
                %1285 = sbr.rel target = $region66
              $region71: #{autoencoder_forward.1} parent=63 // loop_exit
                _
              %s1333 = sshrl.u32 %s1270, 4
              %s1334 = sand.u32 %s1270, 15
              %s1335 = smul.u32 %s1333, 16
              %s1336 = smul.u32 8, %s1335
              %s1337 = scalar_lea.vmem %s1263, %s1336 [#allocation2]
              %s1338 = smul.u32 8, %s1335
              %s1339 = scalar_lea.vmem %s1274, %s1338
              // While loop
              $region72: #{autoencoder_forward.1} parent=63 // loop_pre_header
                _
              $region73: #{autoencoder_forward.1} parent=63 // loop_header
                %s1341 = sphi 0, %s1343
                %p1342 = scmp.ge.s32.totalorder %s1341, %s1334
                %s1346 = sphi 0, %s1353
                %s1347 = sphi %s1337, %s1356
                %s1348 = sphi %s1339, %s1357
              $region74: #{autoencoder_forward.1} parent=63 // loop_header_branch
                %1345 = sbr.rel (%p1342) target = $region78
              $region75: #{autoencoder_forward.1} parent=63 // loop_body
                %v1349 = vld [vmem:[%s1347] sm:%s1283]
                %1350 = vst [vmem:[%s1348] sm:%s1283] %v1349
                %s1351 = sadd.s32 1, %s1346
                %p1352 = scmp.ge.s32.totalorder %s1351, %s1334
                %s1353 = scalar_select %p1352, 0, %s1351
                %s1354 = smul.u32 %s1353, 8
                %s1355 = smul.u32 %s1353, 8
                %s1356 = scalar_lea.vmem %s1337, %s1354 [#allocation2]
                %s1357 = scalar_lea.vmem %s1339, %s1355
              $region76: #{autoencoder_forward.1} parent=63 // loop_footer
                %s1343 = sadd.s32 %s1341, 1
              $region77: #{autoencoder_forward.1} parent=63 // loop_footer_branch
                %1340 = sbr.rel target = $region73
              $region78: #{autoencoder_forward.1} parent=63 // loop_exit
                _
            $region64: #{autoencoder_forward.1} parent=55 // pred_fallthru
              _
          $region56: #{autoencoder_forward.1} parent=51 // pred_fallthru
            _
          %1436 = vnop
        $region52: #{autoencoder_forward.1} parent=47 // pred_fallthru
          _
      $region48: #{autoencoder_forward.1} parent=5 // pred_fallthru
        _
      %p1437 = scmp.le.s32.totalorder 2, %s13
      // Predicated region
      $region101: #{autoencoder_forward.1} parent=5 // pred_check
        %p1438 = pneg %p1437
      $region102: #{autoencoder_forward.1} parent=5 // pred_check_branch
        %1440 = sbr.rel (%p1438) target = $region104
      $region103: #{autoencoder_forward.1} parent=5 // pred_region
        %s1441 = ssub.s32 %s13, 2
        // Predicated region
        $region105: #{autoencoder_forward.1} parent=103 // pred_check
          %p1442 = pneg %p194
        $region106: #{autoencoder_forward.1} parent=103 // pred_check_branch
          %1444 = sbr.rel (%p1442) target = $region108
        $region107: #{autoencoder_forward.1} parent=103 // pred_region
          %s1445 = sand.u32 %s179, 1
          %s1446 = sand.u32 %s179, 1
          %s1447 = smul.addr %s1446, 128
          %s1448 = scalar_lea.vmem [#allocation2], %s1447
        $region108: #{autoencoder_forward.1} parent=103 // pred_fallthru
          _
      $region104: #{autoencoder_forward.1} parent=5 // pred_fallthru
        _
    $region6: #{autoencoder_forward.1} parent=1 // loop_footer
      %s17 = sadd.s32 1, %s13
    $region7: #{autoencoder_forward.1} parent=1 // loop_footer_branch
      %12 = sbr.rel target = $region3
    $region8: #{autoencoder_forward.1} parent=1 // loop_exit
      _

</llo_original>
